<compile_context>
chip_gen: v6e
topology: v6e:2x2x1
jax: 0.10.0
libtpu: 0.0.40
codegen_flags: <defaults>
</compile_context>

<pallas_src>
import functools
import numpy as np

import jax
import jax.numpy as jnp
from jax import lax
from jax.experimental import pallas as pl
from jax.experimental.pallas import tpu as pltpu

C1, C2 = 16, 32          # conv channel widths fixed by the module
LATENT_PAD = 128         # fc2 output padded to a full lane tile


# ------------------------------- fused kernel --------------------------------

def _encoder_kernel(s1_ref, sh_ref, f1_ref, c1b_ref, bmat_ref, c2b_ref,
                    gamma_ref, beta_ref, avg_ref, bcast_ref,
                    wfc1_ref, bfc1_ref, wfc2_ref, bfc2_ref,
                    out_ref, y_ref, acc_ref, *, neg_slope, eps):
    k = pl.program_id(0)
    f32, bf16 = jnp.float32, jnp.bfloat16

    def lrelu(v):
        return jnp.where(v >= 0, v, neg_slope * v)

    @pl.when(k == 0)
    def _():
        # ---- conv1 (3x3, s2, p1, Ci->16) + LeakyReLU: one slab matmul --------
        a1 = jnp.dot(s1_ref[...], f1_ref[...], preferred_element_type=f32)
        a1 = lrelu(a1 + c1b_ref[...]).astype(bf16)        # (2*N*H2, C1*W1)
        nh2 = a1.shape[0] // 2
        r_even = a1[0:nh2, :]                             # conv1 rows 2*i2
        r_odd = a1[nh2:2 * nh2, :]                        # conv1 rows 2*i2 + 1

        # ---- conv2 (3x3, s2, p1, 16->32): three tap matmuls -------------------
        p_mid = jnp.dot(r_even, bmat_ref[1], preferred_element_type=f32)
        p_dn = jnp.dot(r_odd, bmat_ref[2], preferred_element_type=f32)
        p_up = jnp.dot(r_odd, bmat_ref[0], preferred_element_type=f32)
        # kh=0 tap reads conv1 row 2*i2-1 = the odd row of the PREVIOUS output
        # row: shift p_up down by one output-row block (zero for i2 == 0).
        p_up = jnp.dot(sh_ref[...], p_up, preferred_element_type=f32)
        z = p_mid + p_dn + p_up + c2b_ref[...]            # (N*H2, C2*W2)

        # ---- BatchNorm2d(32): training-mode batch stats (biased variance) ----
        m1 = jnp.mean(z, axis=0, keepdims=True)           # (1, C2*W2)
        m2 = jnp.mean(z * z, axis=0, keepdims=True)
        mu_c = jnp.dot(m1, avg_ref[...], preferred_element_type=f32)   # (1, C2)
        ex2_c = jnp.dot(m2, avg_ref[...], preferred_element_type=f32)
        var_c = ex2_c - mu_c * mu_c
        scale_c = gamma_ref[...] * lax.rsqrt(var_c + eps)
        off_c = beta_ref[...] - mu_c * scale_c
        scale_col = jnp.dot(scale_c, bcast_ref[...], preferred_element_type=f32)
        off_col = jnp.dot(off_c, bcast_ref[...], preferred_element_type=f32)
        y = lrelu(z * scale_col + off_col)

        # AdaptiveMaxPool2d((4,4)) is the identity: conv2 output is already 4x4.
        y_ref[...] = y.reshape(y_ref.shape).astype(bf16)  # (H2, N, C2*W2)
        acc_ref[...] = jnp.zeros_like(acc_ref)

    # ---- fc1: stream one (C2*W2, 512) weight block per grid step -------------
    acc_ref[...] += jnp.dot(y_ref[k], wfc1_ref[...], preferred_element_type=f32)

    @pl.when(k == pl.num_programs(0) - 1)
    def _():
        h = lrelu(acc_ref[...] + bfc1_ref[...]).astype(bf16)
        out_ref[...] = jnp.dot(h, wfc2_ref[...], preferred_element_type=f32) + bfc2_ref[...]


# --------------------------------- wrapper -----------------------------------

def encoder_forward(x, params, latent_dim):
    """x: (N, Ci, 16, 16) float32; params: output of fold_params()."""
    N, Ci, H, W = x.shape
    assert H == 16 and W == 16, "folds assume img_size=16 (4x4 adaptive pool = identity)"
    H1, H2 = H // 2, H // 4
    W2 = H2
    NH2 = N * H2
    slab_w = 3 * Ci * W

    # conv1 input row-slabs: rows ordered (even/odd block, i2-major, n-minor),
    # columns (kh, ci, w).  Tiny XLA gather on the raw input, fused with the
    # bf16 cast; everything downstream stays in VMEM inside one pallas_call.
    xp = jnp.pad(x, ((0, 0), (0, 0), (1, 1), (0, 0)))
    slabs = jnp.stack([xp[:, :, d:d + 2 * H1:2, :] for d in range(3)], axis=2)  # (N,Ci,3,H1,W)
    s = jnp.transpose(slabs, (3, 0, 2, 1, 4)).reshape(H1, N, slab_w)
    s1 = jnp.concatenate([s[0::2], s[1::2]], axis=0).reshape(2 * NH2, slab_w)
    s1 = s1.astype(jnp.bfloat16)

    # Row-shift operator for the kh=0 conv2 tap (zero row for i2 == 0).
    # TODO(synk): for very large batches replace with an in-kernel sublane roll+mask.
    sh = jnp.eye(NH2, k=-N, dtype=jnp.float32)

    operands = (s1, sh, params["f1"], params["c1b"], params["bmat"], params["c2b"],
                params["gamma"], params["beta"], params["avg"], params["bcast"],
                params["wfc1"], params["bfc1"], params["wfc2"], params["bfc2"])

    def whole(a):
        nd = a.ndim
        return pl.BlockSpec(a.shape, lambda k: (0,) * nd)

    in_specs = [whole(a) for a in operands]
    # fc1 weight is streamed: one (C2*W2, 512) row-block per grid step.
    wfc1 = params["wfc1"]
    in_specs[10] = pl.BlockSpec((wfc1.shape[0] // H2, wfc1.shape[1]), lambda k: (k, 0))

    out = pl.pallas_call(
        functools.partial(_encoder_kernel, neg_slope=0.2, eps=1e-5),
        grid=(H2,),
        in_specs=in_specs,
        out_specs=pl.BlockSpec((N, LATENT_PAD), lambda k: (0, 0)),
        out_shape=jax.ShapeDtypeStruct((N, LATENT_PAD), jnp.float32),
        scratch_shapes=[
            pltpu.VMEM((H2, N, C2 * W2), jnp.bfloat16),   # post-BN activation
            pltpu.VMEM((N, wfc1.shape[1]), jnp.float32),  # fc1 accumulator
        ],
        compiler_params=pltpu.CompilerParams(dimension_semantics=("arbitrary",)),
    )(*operands)

    # slice the lane-padded fc2 output back to latent_dim
    return out[:, :latent_dim]


# ----------------------- host-side (one-time) weight folding -----------------

def init_torch_params(key, input_channels, latent_dim):
    """Random parameters in PyTorch-equivalent layouts."""
    k = jax.random.split(key, 10)
    flat = C2 * 4 * 4
    return {
        # conv weights in PyTorch (C_out, C_in, kh, kw) layout
        "conv1_w": 0.1 * jax.random.normal(k[0], (C1, input_channels, 3, 3), jnp.float32),
        "conv1_b": 0.1 * jax.random.normal(k[1], (C1,), jnp.float32),
        "conv2_w": 0.1 * jax.random.normal(k[2], (C2, C1, 3, 3), jnp.float32),
        "conv2_b": 0.1 * jax.random.normal(k[3], (C2,), jnp.float32),
        "bn_gamma": 1.0 + 0.1 * jax.random.normal(k[4], (C2,), jnp.float32),
        "bn_beta": 0.1 * jax.random.normal(k[5], (C2,), jnp.float32),
        # fc weights stored (in, out); PyTorch nn.Linear.weight is (out, in) -> transpose when porting.
        "fc1_w": 0.05 * jax.random.normal(k[6], (flat, 512), jnp.float32),
        "fc1_b": 0.1 * jax.random.normal(k[7], (512,), jnp.float32),
        "fc2_w": 0.05 * jax.random.normal(k[8], (512, latent_dim), jnp.float32),
        "fc2_b": 0.1 * jax.random.normal(k[9], (latent_dim,), jnp.float32),
    }


def fold_params(tp, input_channels, img_size, latent_dim):
    """One-time fold of the PyTorch-layout params into kernel operands."""
    Ci, H, W = input_channels, img_size, img_size
    assert img_size == 16, "folds assume img_size=16 (4x4 adaptive pool = identity)"
    H1 = W1 = img_size // 2   # 8
    H2 = W2 = H1 // 2         # 4

    w1 = np.asarray(tp["conv1_w"], np.float32)     # (C1, Ci, 3, 3)
    w2 = np.asarray(tp["conv2_w"], np.float32)     # (C2, C1, 3, 3)

    # conv1 per-output-row fold: row = kh*Ci*W + ci*W + w_in, col = c1*W1 + j1.
    F1 = np.zeros((3 * Ci * W, C1 * W1), np.float32)
    for kh in range(3):
        for kw in range(3):
            for j1 in range(W1):
                w_in = 2 * j1 + kw - 1
                if 0 <= w_in < W:
                    for ci in range(Ci):
                        F1[kh * Ci * W + ci * W + w_in, np.arange(C1) * W1 + j1] = w1[:, ci, kh, kw]

    # conv2 tap matrices: [kh], row = c1*W1 + w_in, col = c2*W2 + j2.
    B = np.zeros((3, C1 * W1, C2 * W2), np.float32)
    for kh in range(3):
        for kw in range(3):
            for j2 in range(W2):
                w_in = 2 * j2 + kw - 1
                if 0 <= w_in < W1:
                    for c1 in range(C1):
                        B[kh, c1 * W1 + w_in, np.arange(C2) * W2 + j2] = w2[:, c1, kh, kw]

    # columns -> channel mean / channel -> columns broadcast (values 0, 1, 1/4)
    avg = np.kron(np.eye(C2, dtype=np.float32), np.ones((W2, 1), np.float32)) / W2   # (C2*W2, C2)
    bcast = np.kron(np.eye(C2, dtype=np.float32), np.ones((1, W2), np.float32))      # (C2, C2*W2)

    # fc1 weight rows reordered into i2-major blocks: row = i2*(C2*W2) + c2*W2 + j2
    # (original torch flatten index is c2*H2*W2 + i2*W2 + j2).
    wfc1 = np.asarray(tp["fc1_w"], np.float32)
    wfc1 = wfc1.reshape(C2, H2, W2, wfc1.shape[1]).transpose(1, 0, 2, 3)
    wfc1 = wfc1.reshape(H2 * C2 * W2, -1)

    # fc2 padded to a full 128-lane output tile (unmasked stores).
    wfc2 = np.zeros((wfc1.shape[1], LATENT_PAD), np.float32)
    wfc2[:, :latent_dim] = np.asarray(tp["fc2_w"], np.float32)
    bfc2 = np.zeros((1, LATENT_PAD), np.float32)
    bfc2[0, :latent_dim] = np.asarray(tp["fc2_b"], np.float32)

    return {
        "f1": jnp.asarray(F1, jnp.bfloat16),
        "c1b": jnp.asarray(np.repeat(np.asarray(tp["conv1_b"], np.float32), W1)[None, :]),
        "bmat": jnp.asarray(B, jnp.bfloat16),
        "c2b": jnp.asarray(np.repeat(np.asarray(tp["conv2_b"], np.float32), W2)[None, :]),
        "gamma": jnp.asarray(np.asarray(tp["bn_gamma"], np.float32)[None, :]),
        "beta": jnp.asarray(np.asarray(tp["bn_beta"], np.float32)[None, :]),
        "avg": jnp.asarray(avg),
        "bcast": jnp.asarray(bcast),
        "wfc1": jnp.asarray(wfc1, jnp.bfloat16),
        "bfc1": jnp.asarray(tp["fc1_b"], jnp.float32)[None, :],
        "wfc2": jnp.asarray(wfc2, jnp.bfloat16),
        "bfc2": jnp.asarray(bfc2),
    }


# ------------------------ pure-JAX reference (for parity) ---------------------

def encoder_reference(x, tp, neg_slope=0.2, eps=1e-5):
    def lrelu(v):
        return jnp.where(v >= 0, v, neg_slope * v)

    y = lax.conv_general_dilated(x, tp["conv1_w"], window_strides=(2, 2),
                                 padding=((1, 1), (1, 1)),
                                 dimension_numbers=("NCHW", "OIHW", "NCHW"))
    y = lrelu(y + tp["conv1_b"][None, :, None, None])
    y = lax.conv_general_dilated(y, tp["conv2_w"], window_strides=(2, 2),
                                 padding=((1, 1), (1, 1)),
                                 dimension_numbers=("NCHW", "OIHW", "NCHW"))
    y = y + tp["conv2_b"][None, :, None, None]
    mu = jnp.mean(y, axis=(0, 2, 3), keepdims=True)
    var = jnp.mean((y - mu) ** 2, axis=(0, 2, 3), keepdims=True)
    y = (y - mu) * lax.rsqrt(var + eps)
    y = lrelu(y * tp["bn_gamma"][None, :, None, None] + tp["bn_beta"][None, :, None, None])
    # AdaptiveMaxPool2d((4,4)) on a 4x4 map is the identity.
    f = y.reshape(y.shape[0], -1)
    h = lrelu(f @ tp["fc1_w"] + tp["fc1_b"])
    return h @ tp["fc2_w"] + tp["fc2_b"]


# ------------------------------------ main ------------------------------------

if __name__ == "__main__":
    input_channels, img_size, latent_dim = 4, 16, 32
    batch = 2

    key = jax.random.PRNGKey(0)
    k_x, k_p = jax.random.split(key)
    x = jax.random.normal(k_x, (batch, input_channels, img_size, img_size), jnp.float32)

    torch_like = init_torch_params(k_p, input_channels, latent_dim)
    params = fold_params(torch_like, input_channels, img_size, latent_dim)

    fwd = jax.jit(functools.partial(encoder_forward, latent_dim=latent_dim))
    out = jax.block_until_ready(fwd(x, params))
    assert out.shape == (batch, latent_dim)

    ref = jax.block_until_ready(encoder_reference(x, torch_like))
    np.testing.assert_allclose(np.asarray(out), np.asarray(ref), atol=8e-2, rtol=8e-2)

    print("KERNEL_OK")
</pallas_src>

<mosaic_0001>
module attributes {stable_mosaic.version = 11 : i64} {
  func.func @_encoder_kernel(%arg0: i32, %arg1: memref<16x192xbf16, #tpu.memory_space<vmem>>, %arg2: memref<8x8xf32, #tpu.memory_space<vmem>>, %arg3: memref<192x128xbf16, #tpu.memory_space<vmem>>, %arg4: memref<1x128xf32, #tpu.memory_space<vmem>>, %arg5: memref<3x128x128xbf16, #tpu.memory_space<vmem>>, %arg6: memref<1x128xf32, #tpu.memory_space<vmem>>, %arg7: memref<1x32xf32, #tpu.memory_space<vmem>>, %arg8: memref<1x32xf32, #tpu.memory_space<vmem>>, %arg9: memref<128x32xf32, #tpu.memory_space<vmem>>, %arg10: memref<32x128xf32, #tpu.memory_space<vmem>>, %arg11: memref<128x512xbf16, #tpu.memory_space<vmem>>, %arg12: memref<1x512xf32, #tpu.memory_space<vmem>>, %arg13: memref<512x128xbf16, #tpu.memory_space<vmem>>, %arg14: memref<1x128xf32, #tpu.memory_space<vmem>>, %arg15: memref<2x128xf32, #tpu.memory_space<vmem>>, %arg16: memref<4x2x128xbf16, #tpu.memory_space<vmem>>, %arg17: memref<2x512xf32, #tpu.memory_space<vmem>>) attributes {dimension_semantics = [#tpu.dimension_semantics<arbitrary>], iteration_bounds = array<i64: 4>, scalar_prefetch = 0 : i64, scratch_operands = 2 : i64, tpu.core_type = #tpu.core_type<tc>, window_params = [{pipeline_mode = #tpu.pipeline_mode<synchronous>, transform_indices = @transform_0, window_bounds = array<i64: 16, 192>}, {pipeline_mode = #tpu.pipeline_mode<synchronous>, transform_indices = @transform_1, window_bounds = array<i64: 8, 8>}, {pipeline_mode = #tpu.pipeline_mode<synchronous>, transform_indices = @transform_2, window_bounds = array<i64: 192, 128>}, {pipeline_mode = #tpu.pipeline_mode<synchronous>, transform_indices = @transform_3, window_bounds = array<i64: 1, 128>}, {pipeline_mode = #tpu.pipeline_mode<synchronous>, transform_indices = @transform_4, window_bounds = array<i64: 3, 128, 128>}, {pipeline_mode = #tpu.pipeline_mode<synchronous>, transform_indices = @transform_5, window_bounds = array<i64: 1, 128>}, {pipeline_mode = #tpu.pipeline_mode<synchronous>, transform_indices = @transform_6, window_bounds = array<i64: 1, 32>}, {pipeline_mode = #tpu.pipeline_mode<synchronous>, transform_indices = @transform_7, window_bounds = array<i64: 1, 32>}, {pipeline_mode = #tpu.pipeline_mode<synchronous>, transform_indices = @transform_8, window_bounds = array<i64: 128, 32>}, {pipeline_mode = #tpu.pipeline_mode<synchronous>, transform_indices = @transform_9, window_bounds = array<i64: 32, 128>}, {transform_indices = @transform_10, window_bounds = array<i64: 128, 512>}, {pipeline_mode = #tpu.pipeline_mode<synchronous>, transform_indices = @transform_11, window_bounds = array<i64: 1, 512>}, {pipeline_mode = #tpu.pipeline_mode<synchronous>, transform_indices = @transform_12, window_bounds = array<i64: 512, 128>}, {pipeline_mode = #tpu.pipeline_mode<synchronous>, transform_indices = @transform_13, window_bounds = array<i64: 1, 128>}, {pipeline_mode = #tpu.pipeline_mode<synchronous>, transform_indices = @transform_14, window_bounds = array<i64: 2, 128>}]} {
    %c0_i32 = arith.constant 0 : i32
    %0 = arith.cmpi eq, %arg0, %c0_i32 : i32
    %1 = arith.extui %0 : i1 to i32
    %c0_i32_0 = arith.constant 0 : i32
    %2 = arith.cmpi ne, %1, %c0_i32_0 : i32
    scf.if %2 {
      %c0_9 = arith.constant 0 : index
      %c0_10 = arith.constant 0 : index
      %14 = vector.load %arg1[%c0_9, %c0_10] : memref<16x192xbf16, #tpu.memory_space<vmem>>, vector<16x192xbf16>
      %c0_11 = arith.constant 0 : index
      %c0_12 = arith.constant 0 : index
      %15 = vector.load %arg3[%c0_11, %c0_12] : memref<192x128xbf16, #tpu.memory_space<vmem>>, vector<192x128xbf16>
      %cst_13 = arith.constant dense<0.000000e+00> : vector<16x128xf32>
      %16 = tpu.matmul %14, %15, %cst_13 {dimension_numbers = #tpu.dot_dimension_numbers<[1], [0], [0], [1], [0, 0, 1, 1], [], []>} : vector<16x192xbf16>, vector<192x128xbf16>, vector<16x128xf32> -> vector<16x128xf32>
      %c0_14 = arith.constant 0 : index
      %c0_15 = arith.constant 0 : index
      %17 = vector.load %arg4[%c0_14, %c0_15] : memref<1x128xf32, #tpu.memory_space<vmem>>, vector<1x128xf32>
      %18 = vector.broadcast %17 : vector<1x128xf32> to vector<16x128xf32>
      %19 = arith.addf %16, %18 : vector<16x128xf32>
      %cst_16 = arith.constant 0.000000e+00 : f32
      %20 = vector.broadcast %cst_16 : f32 to vector<16x128xf32>
      %21 = arith.cmpf oge, %19, %20 : vector<16x128xf32>
      %cst_17 = arith.constant 2.000000e-01 : f32
      %22 = vector.broadcast %cst_17 : f32 to vector<16x128xf32>
      %23 = arith.mulf %22, %19 : vector<16x128xf32>
      %24 = arith.select %21, %19, %23 : vector<16x128xi1>, vector<16x128xf32>
      %25 = arith.truncf %24 : vector<16x128xf32> to vector<16x128xbf16>
      %26 = vector.extract_strided_slice %25 {offsets = [0, 0], sizes = [8, 128], strides = [1, 1]} : vector<16x128xbf16> to vector<8x128xbf16>
      %27 = vector.extract_strided_slice %25 {offsets = [8, 0], sizes = [8, 128], strides = [1, 1]} : vector<16x128xbf16> to vector<8x128xbf16>
      %c1 = arith.constant 1 : index
      %c0_18 = arith.constant 0 : index
      %c0_19 = arith.constant 0 : index
      %28 = vector.load %arg5[%c1, %c0_18, %c0_19] : memref<3x128x128xbf16, #tpu.memory_space<vmem>>, vector<1x128x128xbf16>
      %29 = vector.shape_cast %28 : vector<1x128x128xbf16> to vector<128x128xbf16>
      %cst_20 = arith.constant dense<0.000000e+00> : vector<8x128xf32>
      %30 = tpu.matmul %26, %29, %cst_20 {dimension_numbers = #tpu.dot_dimension_numbers<[1], [0], [0], [1], [0, 0, 1, 1], [], []>} : vector<8x128xbf16>, vector<128x128xbf16>, vector<8x128xf32> -> vector<8x128xf32>
      %c2 = arith.constant 2 : index
      %c0_21 = arith.constant 0 : index
      %c0_22 = arith.constant 0 : index
      %31 = vector.load %arg5[%c2, %c0_21, %c0_22] : memref<3x128x128xbf16, #tpu.memory_space<vmem>>, vector<1x128x128xbf16>
      %32 = vector.shape_cast %31 : vector<1x128x128xbf16> to vector<128x128xbf16>
      %cst_23 = arith.constant dense<0.000000e+00> : vector<8x128xf32>
      %33 = tpu.matmul %27, %32, %cst_23 {dimension_numbers = #tpu.dot_dimension_numbers<[1], [0], [0], [1], [0, 0, 1, 1], [], []>} : vector<8x128xbf16>, vector<128x128xbf16>, vector<8x128xf32> -> vector<8x128xf32>
      %c0_24 = arith.constant 0 : index
      %c0_25 = arith.constant 0 : index
      %c0_26 = arith.constant 0 : index
      %34 = vector.load %arg5[%c0_24, %c0_25, %c0_26] : memref<3x128x128xbf16, #tpu.memory_space<vmem>>, vector<1x128x128xbf16>
      %35 = vector.shape_cast %34 : vector<1x128x128xbf16> to vector<128x128xbf16>
      %cst_27 = arith.constant dense<0.000000e+00> : vector<8x128xf32>
      %36 = tpu.matmul %27, %35, %cst_27 {dimension_numbers = #tpu.dot_dimension_numbers<[1], [0], [0], [1], [0, 0, 1, 1], [], []>} : vector<8x128xbf16>, vector<128x128xbf16>, vector<8x128xf32> -> vector<8x128xf32>
      %c0_28 = arith.constant 0 : index
      %c0_29 = arith.constant 0 : index
      %37 = vector.load %arg2[%c0_28, %c0_29] : memref<8x8xf32, #tpu.memory_space<vmem>>, vector<8x8xf32>
      %cst_30 = arith.constant dense<0.000000e+00> : vector<8x128xf32>
      %38 = tpu.matmul %37, %36, %cst_30 {dimension_numbers = #tpu.dot_dimension_numbers<[1], [0], [0], [1], [0, 0, 1, 1], [], []>} : vector<8x8xf32>, vector<8x128xf32>, vector<8x128xf32> -> vector<8x128xf32>
      %39 = arith.addf %30, %33 : vector<8x128xf32>
      %40 = arith.addf %39, %38 : vector<8x128xf32>
      %c0_31 = arith.constant 0 : index
      %c0_32 = arith.constant 0 : index
      %41 = vector.load %arg6[%c0_31, %c0_32] : memref<1x128xf32, #tpu.memory_space<vmem>>, vector<1x128xf32>
      %42 = vector.broadcast %41 : vector<1x128xf32> to vector<8x128xf32>
      %43 = arith.addf %40, %42 : vector<8x128xf32>
      %cst_33 = arith.constant dense<0.000000e+00> : vector<128xf32>
      %44 = vector.multi_reduction <add>, %43, %cst_33 [0] : vector<8x128xf32> to vector<128xf32>
      %45 = vector.shape_cast %44 : vector<128xf32> to vector<1x128xf32>
      %cst_34 = arith.constant 8.000000e+00 : f32
      %46 = vector.broadcast %cst_34 : f32 to vector<1x128xf32>
      %47 = arith.divf %45, %46 : vector<1x128xf32>
      %48 = arith.mulf %43, %43 : vector<8x128xf32>
      %cst_35 = arith.constant dense<0.000000e+00> : vector<128xf32>
      %49 = vector.multi_reduction <add>, %48, %cst_35 [0] : vector<8x128xf32> to vector<128xf32>
      %50 = vector.shape_cast %49 : vector<128xf32> to vector<1x128xf32>
      %cst_36 = arith.constant 8.000000e+00 : f32
      %51 = vector.broadcast %cst_36 : f32 to vector<1x128xf32>
      %52 = arith.divf %50, %51 : vector<1x128xf32>
      %c0_37 = arith.constant 0 : index
      %c0_38 = arith.constant 0 : index
      %53 = vector.load %arg9[%c0_37, %c0_38] : memref<128x32xf32, #tpu.memory_space<vmem>>, vector<128x32xf32>
      %cst_39 = arith.constant dense<0.000000e+00> : vector<1x32xf32>
      %54 = tpu.matmul %47, %53, %cst_39 {dimension_numbers = #tpu.dot_dimension_numbers<[1], [0], [0], [1], [0, 0, 1, 1], [], []>} : vector<1x128xf32>, vector<128x32xf32>, vector<1x32xf32> -> vector<1x32xf32>
      %c0_40 = arith.constant 0 : index
      %c0_41 = arith.constant 0 : index
      %55 = vector.load %arg9[%c0_40, %c0_41] : memref<128x32xf32, #tpu.memory_space<vmem>>, vector<128x32xf32>
      %cst_42 = arith.constant dense<0.000000e+00> : vector<1x32xf32>
      %56 = tpu.matmul %52, %55, %cst_42 {dimension_numbers = #tpu.dot_dimension_numbers<[1], [0], [0], [1], [0, 0, 1, 1], [], []>} : vector<1x128xf32>, vector<128x32xf32>, vector<1x32xf32> -> vector<1x32xf32>
      %57 = arith.mulf %54, %54 : vector<1x32xf32>
      %58 = arith.subf %56, %57 : vector<1x32xf32>
      %c0_43 = arith.constant 0 : index
      %c0_44 = arith.constant 0 : index
      %59 = vector.load %arg7[%c0_43, %c0_44] : memref<1x32xf32, #tpu.memory_space<vmem>>, vector<1x32xf32>
      %cst_45 = arith.constant 9.99999974E-6 : f32
      %60 = vector.broadcast %cst_45 : f32 to vector<1x32xf32>
      %61 = arith.addf %58, %60 : vector<1x32xf32>
      %62 = math.rsqrt %61 : vector<1x32xf32>
      %63 = arith.mulf %59, %62 : vector<1x32xf32>
      %c0_46 = arith.constant 0 : index
      %c0_47 = arith.constant 0 : index
      %64 = vector.load %arg8[%c0_46, %c0_47] : memref<1x32xf32, #tpu.memory_space<vmem>>, vector<1x32xf32>
      %65 = arith.mulf %54, %63 : vector<1x32xf32>
      %66 = arith.subf %64, %65 : vector<1x32xf32>
      %c0_48 = arith.constant 0 : index
      %c0_49 = arith.constant 0 : index
      %67 = vector.load %arg10[%c0_48, %c0_49] : memref<32x128xf32, #tpu.memory_space<vmem>>, vector<32x128xf32>
      %cst_50 = arith.constant dense<0.000000e+00> : vector<1x128xf32>
      %68 = tpu.matmul %63, %67, %cst_50 {dimension_numbers = #tpu.dot_dimension_numbers<[1], [0], [0], [1], [0, 0, 1, 1], [], []>} : vector<1x32xf32>, vector<32x128xf32>, vector<1x128xf32> -> vector<1x128xf32>
      %c0_51 = arith.constant 0 : index
      %c0_52 = arith.constant 0 : index
      %69 = vector.load %arg10[%c0_51, %c0_52] : memref<32x128xf32, #tpu.memory_space<vmem>>, vector<32x128xf32>
      %cst_53 = arith.constant dense<0.000000e+00> : vector<1x128xf32>
      %70 = tpu.matmul %66, %69, %cst_53 {dimension_numbers = #tpu.dot_dimension_numbers<[1], [0], [0], [1], [0, 0, 1, 1], [], []>} : vector<1x32xf32>, vector<32x128xf32>, vector<1x128xf32> -> vector<1x128xf32>
      %71 = vector.broadcast %68 : vector<1x128xf32> to vector<8x128xf32>
      %72 = arith.mulf %43, %71 : vector<8x128xf32>
      %73 = vector.broadcast %70 : vector<1x128xf32> to vector<8x128xf32>
      %74 = arith.addf %72, %73 : vector<8x128xf32>
      %cst_54 = arith.constant 0.000000e+00 : f32
      %75 = vector.broadcast %cst_54 : f32 to vector<8x128xf32>
      %76 = arith.cmpf oge, %74, %75 : vector<8x128xf32>
      %cst_55 = arith.constant 2.000000e-01 : f32
      %77 = vector.broadcast %cst_55 : f32 to vector<8x128xf32>
      %78 = arith.mulf %77, %74 : vector<8x128xf32>
      %79 = arith.select %76, %74, %78 : vector<8x128xi1>, vector<8x128xf32>
      %80 = vector.shape_cast %79 : vector<8x128xf32> to vector<4x2x128xf32>
      %81 = arith.truncf %80 : vector<4x2x128xf32> to vector<4x2x128xbf16>
      %c0_56 = arith.constant 0 : index
      %c0_57 = arith.constant 0 : index
      %c0_58 = arith.constant 0 : index
      %82 = vector.load %arg16[%c0_56, %c0_57, %c0_58] : memref<4x2x128xbf16, #tpu.memory_space<vmem>>, vector<4x2x128xbf16>
      tpu.vector_store %arg16[%c0_56, %c0_57, %c0_58], %81 {strides = array<i32>} : memref<4x2x128xbf16, #tpu.memory_space<vmem>>, vector<4x2x128xbf16>,
      %cst_59 = arith.constant 0.000000e+00 : f32
      %83 = vector.broadcast %cst_59 : f32 to vector<2x512xf32>
      %c0_60 = arith.constant 0 : index
      %c0_61 = arith.constant 0 : index
      %84 = vector.load %arg17[%c0_60, %c0_61] : memref<2x512xf32, #tpu.memory_space<vmem>>, vector<2x512xf32>
      tpu.vector_store %arg17[%c0_60, %c0_61], %83 {strides = array<i32>} : memref<2x512xf32, #tpu.memory_space<vmem>>, vector<2x512xf32>,
    } else {
    }
    %c0 = arith.constant 0 : index
    %c0_1 = arith.constant 0 : index
    %3 = vector.load %arg17[%c0, %c0_1] : memref<2x512xf32, #tpu.memory_space<vmem>>, vector<2x512xf32>
    %4 = arith.index_cast %arg0 : i32 to index
    %c0_2 = arith.constant 0 : index
    %c0_3 = arith.constant 0 : index
    %5 = vector.load %arg16[%4, %c0_2, %c0_3] : memref<4x2x128xbf16, #tpu.memory_space<vmem>>, vector<1x2x128xbf16>
    %6 = vector.shape_cast %5 : vector<1x2x128xbf16> to vector<2x128xbf16>
    %c0_4 = arith.constant 0 : index
    %c0_5 = arith.constant 0 : index
    %7 = vector.load %arg11[%c0_4, %c0_5] : memref<128x512xbf16, #tpu.memory_space<vmem>>, vector<128x512xbf16>
    %cst = arith.constant dense<0.000000e+00> : vector<2x512xf32>
    %8 = tpu.matmul %6, %7, %cst {dimension_numbers = #tpu.dot_dimension_numbers<[1], [0], [0], [1], [0, 0, 1, 1], [], []>} : vector<2x128xbf16>, vector<128x512xbf16>, vector<2x512xf32> -> vector<2x512xf32>
    %9 = arith.addf %3, %8 : vector<2x512xf32>
    %c0_6 = arith.constant 0 : index
    %c0_7 = arith.constant 0 : index
    %10 = vector.load %arg17[%c0_6, %c0_7] : memref<2x512xf32, #tpu.memory_space<vmem>>, vector<2x512xf32>
    tpu.vector_store %arg17[%c0_6, %c0_7], %9 {strides = array<i32>} : memref<2x512xf32, #tpu.memory_space<vmem>>, vector<2x512xf32>,
    %c3_i32 = arith.constant 3 : i32
    %11 = arith.cmpi eq, %arg0, %c3_i32 : i32
    %12 = arith.extui %11 : i1 to i32
    %c0_i32_8 = arith.constant 0 : i32
    %13 = arith.cmpi ne, %12, %c0_i32_8 : i32
    scf.if %13 {
      %c0_9 = arith.constant 0 : index
      %c0_10 = arith.constant 0 : index
      %14 = vector.load %arg17[%c0_9, %c0_10] : memref<2x512xf32, #tpu.memory_space<vmem>>, vector<2x512xf32>
      %c0_11 = arith.constant 0 : index
      %c0_12 = arith.constant 0 : index
      %15 = vector.load %arg12[%c0_11, %c0_12] : memref<1x512xf32, #tpu.memory_space<vmem>>, vector<1x512xf32>
      %16 = vector.broadcast %15 : vector<1x512xf32> to vector<2x512xf32>
      %17 = arith.addf %14, %16 : vector<2x512xf32>
      %cst_13 = arith.constant 0.000000e+00 : f32
      %18 = vector.broadcast %cst_13 : f32 to vector<2x512xf32>
      %19 = arith.cmpf oge, %17, %18 : vector<2x512xf32>
      %cst_14 = arith.constant 2.000000e-01 : f32
      %20 = vector.broadcast %cst_14 : f32 to vector<2x512xf32>
      %21 = arith.mulf %20, %17 : vector<2x512xf32>
      %22 = arith.select %19, %17, %21 : vector<2x512xi1>, vector<2x512xf32>
      %23 = arith.truncf %22 : vector<2x512xf32> to vector<2x512xbf16>
      %c0_15 = arith.constant 0 : index
      %c0_16 = arith.constant 0 : index
      %24 = vector.load %arg13[%c0_15, %c0_16] : memref<512x128xbf16, #tpu.memory_space<vmem>>, vector<512x128xbf16>
      %cst_17 = arith.constant dense<0.000000e+00> : vector<2x128xf32>
      %25 = tpu.matmul %23, %24, %cst_17 {dimension_numbers = #tpu.dot_dimension_numbers<[1], [0], [0], [1], [0, 0, 1, 1], [], []>} : vector<2x512xbf16>, vector<512x128xbf16>, vector<2x128xf32> -> vector<2x128xf32>
      %c0_18 = arith.constant 0 : index
      %c0_19 = arith.constant 0 : index
      %26 = vector.load %arg14[%c0_18, %c0_19] : memref<1x128xf32, #tpu.memory_space<vmem>>, vector<1x128xf32>
      %27 = vector.broadcast %26 : vector<1x128xf32> to vector<2x128xf32>
      %28 = arith.addf %25, %27 : vector<2x128xf32>
      %c0_20 = arith.constant 0 : index
      %c0_21 = arith.constant 0 : index
      %29 = vector.load %arg15[%c0_20, %c0_21] : memref<2x128xf32, #tpu.memory_space<vmem>>, vector<2x128xf32>
      tpu.vector_store %arg15[%c0_20, %c0_21], %28 {strides = array<i32>} : memref<2x128xf32, #tpu.memory_space<vmem>>, vector<2x128xf32>,
    } else {
    }
    return
  }
  func.func @transform_0(%arg0: i32) -> (i32, i32) {
    %c0_i32 = arith.constant 0 : i32
    %c0_i32_0 = arith.constant 0 : i32
    %c0_i32_1 = arith.constant 0 : i32
    return %c0_i32, %c0_i32_0 : i32, i32
  }
  func.func @transform_1(%arg0: i32) -> (i32, i32) {
    %c0_i32 = arith.constant 0 : i32
    %c0_i32_0 = arith.constant 0 : i32
    %c0_i32_1 = arith.constant 0 : i32
    return %c0_i32, %c0_i32_0 : i32, i32
  }
  func.func @transform_2(%arg0: i32) -> (i32, i32) {
    %c0_i32 = arith.constant 0 : i32
    %c0_i32_0 = arith.constant 0 : i32
    %c0_i32_1 = arith.constant 0 : i32
    return %c0_i32, %c0_i32_0 : i32, i32
  }
  func.func @transform_3(%arg0: i32) -> (i32, i32) {
    %c0_i32 = arith.constant 0 : i32
    %c0_i32_0 = arith.constant 0 : i32
    %c0_i32_1 = arith.constant 0 : i32
    return %c0_i32, %c0_i32_0 : i32, i32
  }
  func.func @transform_4(%arg0: i32) -> (i32, i32, i32) {
    %c0_i32 = arith.constant 0 : i32
    %c0_i32_0 = arith.constant 0 : i32
    %c0_i32_1 = arith.constant 0 : i32
    %c0_i32_2 = arith.constant 0 : i32
    return %c0_i32, %c0_i32_0, %c0_i32_1 : i32, i32, i32
  }
  func.func @transform_5(%arg0: i32) -> (i32, i32) {
    %c0_i32 = arith.constant 0 : i32
    %c0_i32_0 = arith.constant 0 : i32
    %c0_i32_1 = arith.constant 0 : i32
    return %c0_i32, %c0_i32_0 : i32, i32
  }
  func.func @transform_6(%arg0: i32) -> (i32, i32) {
    %c0_i32 = arith.constant 0 : i32
    %c0_i32_0 = arith.constant 0 : i32
    %c0_i32_1 = arith.constant 0 : i32
    return %c0_i32, %c0_i32_0 : i32, i32
  }
  func.func @transform_7(%arg0: i32) -> (i32, i32) {
    %c0_i32 = arith.constant 0 : i32
    %c0_i32_0 = arith.constant 0 : i32
    %c0_i32_1 = arith.constant 0 : i32
    return %c0_i32, %c0_i32_0 : i32, i32
  }
  func.func @transform_8(%arg0: i32) -> (i32, i32) {
    %c0_i32 = arith.constant 0 : i32
    %c0_i32_0 = arith.constant 0 : i32
    %c0_i32_1 = arith.constant 0 : i32
    return %c0_i32, %c0_i32_0 : i32, i32
  }
  func.func @transform_9(%arg0: i32) -> (i32, i32) {
    %c0_i32 = arith.constant 0 : i32
    %c0_i32_0 = arith.constant 0 : i32
    %c0_i32_1 = arith.constant 0 : i32
    return %c0_i32, %c0_i32_0 : i32, i32
  }
  func.func @transform_10(%arg0: i32) -> (i32, i32) {
    %c0_i32 = arith.constant 0 : i32
    %c0_i32_0 = arith.constant 0 : i32
    return %arg0, %c0_i32 : i32, i32
  }
  func.func @transform_11(%arg0: i32) -> (i32, i32) {
    %c0_i32 = arith.constant 0 : i32
    %c0_i32_0 = arith.constant 0 : i32
    %c0_i32_1 = arith.constant 0 : i32
    return %c0_i32, %c0_i32_0 : i32, i32
  }
  func.func @transform_12(%arg0: i32) -> (i32, i32) {
    %c0_i32 = arith.constant 0 : i32
    %c0_i32_0 = arith.constant 0 : i32
    %c0_i32_1 = arith.constant 0 : i32
    return %c0_i32, %c0_i32_0 : i32, i32
  }
  func.func @transform_13(%arg0: i32) -> (i32, i32) {
    %c0_i32 = arith.constant 0 : i32
    %c0_i32_0 = arith.constant 0 : i32
    %c0_i32_1 = arith.constant 0 : i32
    return %c0_i32, %c0_i32_0 : i32, i32
  }
  func.func @transform_14(%arg0: i32) -> (i32, i32) {
    %c0_i32 = arith.constant 0 : i32
    %c0_i32_0 = arith.constant 0 : i32
    %c0_i32_1 = arith.constant 0 : i32
    return %c0_i32, %c0_i32_0 : i32, i32
  }
}

</mosaic_0001>

<llo_original>
// kernel: encoder_forward.1
$region0: #{encoder_forward.1}
  #allocation0 [shape = 'u32[]', space=smem, size = 0x4, offset = 0x4, fixed_abs, tag = 'smem constant byte address 0x4 - core index']
  #allocation1 [shape = 'u32[144,128]{1,0:T(1,128)}', space=vmem, size = 0x12000, scoped, tag = 'internal scratch']
  #allocation2 [shape = 'bf16[4,2,128]{2,1,0:T(2,128)(2,1)}', space=vmem, size = 0x800, scoped, tag = 'scratch operand']
  #allocation3 [shape = 'f32[2,512]{1,0:T(2,128)}', space=vmem, size = 0x1000, scoped, tag = 'scratch operand']
  %s0 = inlined_call_operand.vmem [shape: bf16[16,192], index: 0, kind: input, shape index: {}]
  %s1 = inlined_call_operand.vmem [shape: f32[8,8], index: 1, kind: input, shape index: {}]
  %s2 = inlined_call_operand.hbm [shape: bf16[192,128], index: 2, kind: input, shape index: {}]
  %s3 = inlined_call_operand.vmem [shape: f32[1,128], index: 3, kind: input, shape index: {}]
  %s4 = inlined_call_operand.vmem [shape: bf16[3,128,128], index: 4, kind: input, shape index: {}]
  %s5 = inlined_call_operand.vmem [shape: f32[1,128], index: 5, kind: input, shape index: {}]
  %s6 = inlined_call_operand.vmem [shape: f32[1,32], index: 6, kind: input, shape index: {}]
  %s7 = inlined_call_operand.vmem [shape: f32[1,32], index: 7, kind: input, shape index: {}]
  %s8 = inlined_call_operand.vmem [shape: f32[128,32], index: 8, kind: input, shape index: {}]
  %s9 = inlined_call_operand.hbm [shape: f32[32,128], index: 9, kind: input, shape index: {}]
  %s10 = inlined_call_operand.vmem [shape: bf16[512,512], index: 10, kind: input, shape index: {}]
  %s11 = inlined_call_operand.vmem [shape: f32[1,512], index: 11, kind: input, shape index: {}]
  %s12 = inlined_call_operand.hbm [shape: bf16[512,128], index: 12, kind: input, shape index: {}]
  %s13 = inlined_call_operand.vmem [shape: f32[1,128], index: 13, kind: input, shape index: {}]
  %s14 = inlined_call_operand.hbm [shape: f32[2,128], index: 14, kind: output, shape index: {}]
  %s15 = sld [smem:[#allocation0]]
  $region109: #{encoder_forward.1} parent=0
    _
  %s17 = ssub.s32 1, %s15
  %s18 = scalar_select 0, %s17, %s15
  $region1: #{encoder_forward.1} parent=0
    #allocation4 [shape = 'u8[49152]{0}', space=vmem, size = 0xc000, scoped, tag = 'input window, operand 2, single buffered']
    #allocation5 [shape = 's32[2]{0}', space=sflag, size = 0x8, scoped, tag = 'scoped memory for encoder_forward.1']
    #allocation6 [shape = 's32[2]{0}', space=sflag, size = 0x8, scoped, tag = 'scoped memory for encoder_forward.1']
    #allocation7 [shape = 'u8[16384]{0}', space=vmem, size = 0x4000, scoped, tag = 'input window, operand 9, single buffered']
    #allocation8 [shape = 's32[1]{0}', space=sflag, size = 0x4, scoped, tag = 'scoped memory for encoder_forward.1']
    #allocation9 [shape = 'u8[131072]{0}', space=vmem, size = 0x20000, scoped, tag = 'input window, operand 12, single buffered']
    #allocation10 [shape = 'u8[1024]{0}', space=vmem, size = 0x400, scoped, tag = 'output window, operand 0, single buffered']
    %19 = vsyncpa [#allocation5], 0
    %20 = vsyncpa [#allocation8], 0
    %21 = vsyncpa [#allocation6], 0
    loop: start=0, step=1, limit=6
    $region2: #{encoder_forward.1} parent=1 // loop_pre_header
      _
    $region3: #{encoder_forward.1} parent=1 // loop_header
      %s23 = sphi 0, %s27
      %p24 = scmp.ge.s32.totalorder %s23, 6
      %s31 = sphi 0, %s31
      %s33 = sphi 0, %s31
      %s34 = sphi 0, %s33
      %s48 = sphi 0, %s34
      %s52 = sphi 0, %s52
      %s54 = sphi 0, %s52
      %s55 = sphi 0, %s54
      %s69 = sphi 0, %s55
      %s73 = sphi 0, %s73
      %s75 = sphi 0, %s73
      %s76 = sphi 0, %s75
      %s90 = sphi 0, %s76
      %s94 = sphi 0, %s94
      %s96 = sphi 0, %s94
      %s97 = sphi 0, %s96
      %s111 = sphi 0, %s97
      %s115 = sphi 0, %s115
      %s117 = sphi 0, %s115
      %s118 = sphi 0, %s117
      %s132 = sphi 0, %s118
      %s136 = sphi 0, %s136
      %s138 = sphi 0, %s136
      %s139 = sphi 0, %s138
      %s153 = sphi 0, %s139
      %s157 = sphi 0, %s157
      %s159 = sphi 0, %s157
      %s160 = sphi 0, %s159
      %s174 = sphi 0, %s160
      %s178 = sphi 0, %s178
      %s180 = sphi 0, %s178
      %s181 = sphi 0, %s180
      %s195 = sphi 0, %s181
      %s199 = sphi 0, %s199
      %s201 = sphi 0, %s199
      %s202 = sphi 0, %s201
      %s216 = sphi 0, %s202
      %s220 = sphi 0, %s220
      %s222 = sphi 0, %s220
      %s223 = sphi 0, %s222
      %s237 = sphi 0, %s223
      %s243 = sphi 0, %s245
      %s246 = sphi 0, %s243
      %s247 = sphi 0, %s246
      %s263 = sphi 0, %s247
      %s267 = sphi 0, %s267
      %s269 = sphi 0, %s267
      %s270 = sphi 0, %s269
      %s284 = sphi 0, %s270
      %s288 = sphi 0, %s288
      %s290 = sphi 0, %s288
      %s291 = sphi 0, %s290
      %s305 = sphi 0, %s291
      %s309 = sphi 0, %s309
      %s311 = sphi 0, %s309
      %s312 = sphi 0, %s311
      %s326 = sphi 0, %s312
      %s330 = sphi 0, %s330
      %s332 = sphi 0, %s330
      %s333 = sphi 0, %s332
      %s347 = sphi 0, %s333
    $region4: #{encoder_forward.1} parent=1 // loop_header_branch
      %26 = sbr.rel (%p24) target = $region8
    $region5: #{encoder_forward.1} parent=1 // loop_body
      %s28 = ssub.s32 %s23, 1
      %s29 = ssub.s32 %s23, 2
      %s30 = sadd.s32 %s23, 1
      %s32 = sadd.s32 %s31, 1
      %p35 = scmp.eq.s32.totalorder %s23, 3
      %p36 = scmp.ne.s32.totalorder %s31, %s33
      %p37 = scmp.eq.s32.totalorder %s23, 0
      %p38 = por %p36, %p37
      %p39 = scmp.ne.s32.totalorder %s31, %s33
      %p40 = scmp.eq.s32.totalorder %s28, 3
      %p41 = por %p39, %p40
      %p42 = scmp.ne.s32.totalorder %s33, %s34
      %p43 = scmp.eq.s32.totalorder %s28, 0
      %p44 = por %p42, %p43
      %p45 = scmp.ne.s32.totalorder %s33, %s34
      %p46 = scmp.eq.s32.totalorder %s29, 3
      %p47 = por %p45, %p46
      %p49 = scmp.ne.s32.totalorder %s34, %s48
      %p50 = scmp.eq.s32.totalorder %s29, 0
      %p51 = por %p49, %p50
      %s53 = sadd.s32 %s52, 1
      %p56 = scmp.eq.s32.totalorder %s23, 3
      %p57 = scmp.ne.s32.totalorder %s52, %s54
      %p58 = scmp.eq.s32.totalorder %s23, 0
      %p59 = por %p57, %p58
      %p60 = scmp.ne.s32.totalorder %s52, %s54
      %p61 = scmp.eq.s32.totalorder %s28, 3
      %p62 = por %p60, %p61
      %p63 = scmp.ne.s32.totalorder %s54, %s55
      %p64 = scmp.eq.s32.totalorder %s28, 0
      %p65 = por %p63, %p64
      %p66 = scmp.ne.s32.totalorder %s54, %s55
      %p67 = scmp.eq.s32.totalorder %s29, 3
      %p68 = por %p66, %p67
      %p70 = scmp.ne.s32.totalorder %s55, %s69
      %p71 = scmp.eq.s32.totalorder %s29, 0
      %p72 = por %p70, %p71
      %s74 = sadd.s32 %s73, 1
      %p77 = scmp.eq.s32.totalorder %s23, 3
      %p78 = scmp.ne.s32.totalorder %s73, %s75
      %p79 = scmp.eq.s32.totalorder %s23, 0
      %p80 = por %p78, %p79
      %p81 = scmp.ne.s32.totalorder %s73, %s75
      %p82 = scmp.eq.s32.totalorder %s28, 3
      %p83 = por %p81, %p82
      %p84 = scmp.ne.s32.totalorder %s75, %s76
      %p85 = scmp.eq.s32.totalorder %s28, 0
      %p86 = por %p84, %p85
      %p87 = scmp.ne.s32.totalorder %s75, %s76
      %p88 = scmp.eq.s32.totalorder %s29, 3
      %p89 = por %p87, %p88
      %p91 = scmp.ne.s32.totalorder %s76, %s90
      %p92 = scmp.eq.s32.totalorder %s29, 0
      %p93 = por %p91, %p92
      %s95 = sadd.s32 %s94, 1
      %p98 = scmp.eq.s32.totalorder %s23, 3
      %p99 = scmp.ne.s32.totalorder %s94, %s96
      %p100 = scmp.eq.s32.totalorder %s23, 0
      %p101 = por %p99, %p100
      %p102 = scmp.ne.s32.totalorder %s94, %s96
      %p103 = scmp.eq.s32.totalorder %s28, 3
      %p104 = por %p102, %p103
      %p105 = scmp.ne.s32.totalorder %s96, %s97
      %p106 = scmp.eq.s32.totalorder %s28, 0
      %p107 = por %p105, %p106
      %p108 = scmp.ne.s32.totalorder %s96, %s97
      %p109 = scmp.eq.s32.totalorder %s29, 3
      %p110 = por %p108, %p109
      %p112 = scmp.ne.s32.totalorder %s97, %s111
      %p113 = scmp.eq.s32.totalorder %s29, 0
      %p114 = por %p112, %p113
      %s116 = sadd.s32 %s115, 1
      %p119 = scmp.eq.s32.totalorder %s23, 3
      %p120 = scmp.ne.s32.totalorder %s115, %s117
      %p121 = scmp.eq.s32.totalorder %s23, 0
      %p122 = por %p120, %p121
      %p123 = scmp.ne.s32.totalorder %s115, %s117
      %p124 = scmp.eq.s32.totalorder %s28, 3
      %p125 = por %p123, %p124
      %p126 = scmp.ne.s32.totalorder %s117, %s118
      %p127 = scmp.eq.s32.totalorder %s28, 0
      %p128 = por %p126, %p127
      %p129 = scmp.ne.s32.totalorder %s117, %s118
      %p130 = scmp.eq.s32.totalorder %s29, 3
      %p131 = por %p129, %p130
      %p133 = scmp.ne.s32.totalorder %s118, %s132
      %p134 = scmp.eq.s32.totalorder %s29, 0
      %p135 = por %p133, %p134
      %s137 = sadd.s32 %s136, 1
      %p140 = scmp.eq.s32.totalorder %s23, 3
      %p141 = scmp.ne.s32.totalorder %s136, %s138
      %p142 = scmp.eq.s32.totalorder %s23, 0
      %p143 = por %p141, %p142
      %p144 = scmp.ne.s32.totalorder %s136, %s138
      %p145 = scmp.eq.s32.totalorder %s28, 3
      %p146 = por %p144, %p145
      %p147 = scmp.ne.s32.totalorder %s138, %s139
      %p148 = scmp.eq.s32.totalorder %s28, 0
      %p149 = por %p147, %p148
      %p150 = scmp.ne.s32.totalorder %s138, %s139
      %p151 = scmp.eq.s32.totalorder %s29, 3
      %p152 = por %p150, %p151
      %p154 = scmp.ne.s32.totalorder %s139, %s153
      %p155 = scmp.eq.s32.totalorder %s29, 0
      %p156 = por %p154, %p155
      %s158 = sadd.s32 %s157, 1
      %p161 = scmp.eq.s32.totalorder %s23, 3
      %p162 = scmp.ne.s32.totalorder %s157, %s159
      %p163 = scmp.eq.s32.totalorder %s23, 0
      %p164 = por %p162, %p163
      %p165 = scmp.ne.s32.totalorder %s157, %s159
      %p166 = scmp.eq.s32.totalorder %s28, 3
      %p167 = por %p165, %p166
      %p168 = scmp.ne.s32.totalorder %s159, %s160
      %p169 = scmp.eq.s32.totalorder %s28, 0
      %p170 = por %p168, %p169
      %p171 = scmp.ne.s32.totalorder %s159, %s160
      %p172 = scmp.eq.s32.totalorder %s29, 3
      %p173 = por %p171, %p172
      %p175 = scmp.ne.s32.totalorder %s160, %s174
      %p176 = scmp.eq.s32.totalorder %s29, 0
      %p177 = por %p175, %p176
      %s179 = sadd.s32 %s178, 1
      %p182 = scmp.eq.s32.totalorder %s23, 3
      %p183 = scmp.ne.s32.totalorder %s178, %s180
      %p184 = scmp.eq.s32.totalorder %s23, 0
      %p185 = por %p183, %p184
      %p186 = scmp.ne.s32.totalorder %s178, %s180
      %p187 = scmp.eq.s32.totalorder %s28, 3
      %p188 = por %p186, %p187
      %p189 = scmp.ne.s32.totalorder %s180, %s181
      %p190 = scmp.eq.s32.totalorder %s28, 0
      %p191 = por %p189, %p190
      %p192 = scmp.ne.s32.totalorder %s180, %s181
      %p193 = scmp.eq.s32.totalorder %s29, 3
      %p194 = por %p192, %p193
      %p196 = scmp.ne.s32.totalorder %s181, %s195
      %p197 = scmp.eq.s32.totalorder %s29, 0
      %p198 = por %p196, %p197
      %s200 = sadd.s32 %s199, 1
      %p203 = scmp.eq.s32.totalorder %s23, 3
      %p204 = scmp.ne.s32.totalorder %s199, %s201
      %p205 = scmp.eq.s32.totalorder %s23, 0
      %p206 = por %p204, %p205
      %p207 = scmp.ne.s32.totalorder %s199, %s201
      %p208 = scmp.eq.s32.totalorder %s28, 3
      %p209 = por %p207, %p208
      %p210 = scmp.ne.s32.totalorder %s201, %s202
      %p211 = scmp.eq.s32.totalorder %s28, 0
      %p212 = por %p210, %p211
      %p213 = scmp.ne.s32.totalorder %s201, %s202
      %p214 = scmp.eq.s32.totalorder %s29, 3
      %p215 = por %p213, %p214
      %p217 = scmp.ne.s32.totalorder %s202, %s216
      %p218 = scmp.eq.s32.totalorder %s29, 0
      %p219 = por %p217, %p218
      %s221 = sadd.s32 %s220, 1
      %p224 = scmp.eq.s32.totalorder %s23, 3
      %p225 = scmp.ne.s32.totalorder %s220, %s222
      %p226 = scmp.eq.s32.totalorder %s23, 0
      %p227 = por %p225, %p226
      %p228 = scmp.ne.s32.totalorder %s220, %s222
      %p229 = scmp.eq.s32.totalorder %s28, 3
      %p230 = por %p228, %p229
      %p231 = scmp.ne.s32.totalorder %s222, %s223
      %p232 = scmp.eq.s32.totalorder %s28, 0
      %p233 = por %p231, %p232
      %p234 = scmp.ne.s32.totalorder %s222, %s223
      %p235 = scmp.eq.s32.totalorder %s29, 3
      %p236 = por %p234, %p235
      %p238 = scmp.ne.s32.totalorder %s223, %s237
      %p239 = scmp.eq.s32.totalorder %s29, 0
      %p240 = por %p238, %p239
      %s241 = ssub.s32 %s23, %s30
      %p242 = scmp.eq.s32.totalorder %s241, 0
      %s244 = sadd.s32 %s243, 1
      %s245 = scalar_select %p242, %s243, %s244
      %p248 = pneg %p242
      %p249 = scmp.eq.s32.totalorder %s23, 3
      %p250 = por %p248, %p249
      %p251 = scmp.ne.s32.totalorder %s243, %s246
      %p252 = scmp.eq.s32.totalorder %s23, 0
      %p253 = por %p251, %p252
      %p254 = scmp.ne.s32.totalorder %s243, %s246
      %p255 = scmp.eq.s32.totalorder %s28, 3
      %p256 = por %p254, %p255
      %p257 = scmp.ne.s32.totalorder %s246, %s247
      %p258 = scmp.eq.s32.totalorder %s28, 0
      %p259 = por %p257, %p258
      %p260 = scmp.ne.s32.totalorder %s246, %s247
      %p261 = scmp.eq.s32.totalorder %s29, 3
      %p262 = por %p260, %p261
      %p264 = scmp.ne.s32.totalorder %s247, %s263
      %p265 = scmp.eq.s32.totalorder %s29, 0
      %p266 = por %p264, %p265
      %s268 = sadd.s32 %s267, 1
      %p271 = scmp.eq.s32.totalorder %s23, 3
      %p272 = scmp.ne.s32.totalorder %s267, %s269
      %p273 = scmp.eq.s32.totalorder %s23, 0
      %p274 = por %p272, %p273
      %p275 = scmp.ne.s32.totalorder %s267, %s269
      %p276 = scmp.eq.s32.totalorder %s28, 3
      %p277 = por %p275, %p276
      %p278 = scmp.ne.s32.totalorder %s269, %s270
      %p279 = scmp.eq.s32.totalorder %s28, 0
      %p280 = por %p278, %p279
      %p281 = scmp.ne.s32.totalorder %s269, %s270
      %p282 = scmp.eq.s32.totalorder %s29, 3
      %p283 = por %p281, %p282
      %p285 = scmp.ne.s32.totalorder %s270, %s284
      %p286 = scmp.eq.s32.totalorder %s29, 0
      %p287 = por %p285, %p286
      %s289 = sadd.s32 %s288, 1
      %p292 = scmp.eq.s32.totalorder %s23, 3
      %p293 = scmp.ne.s32.totalorder %s288, %s290
      %p294 = scmp.eq.s32.totalorder %s23, 0
      %p295 = por %p293, %p294
      %p296 = scmp.ne.s32.totalorder %s288, %s290
      %p297 = scmp.eq.s32.totalorder %s28, 3
      %p298 = por %p296, %p297
      %p299 = scmp.ne.s32.totalorder %s290, %s291
      %p300 = scmp.eq.s32.totalorder %s28, 0
      %p301 = por %p299, %p300
      %p302 = scmp.ne.s32.totalorder %s290, %s291
      %p303 = scmp.eq.s32.totalorder %s29, 3
      %p304 = por %p302, %p303
      %p306 = scmp.ne.s32.totalorder %s291, %s305
      %p307 = scmp.eq.s32.totalorder %s29, 0
      %p308 = por %p306, %p307
      %s310 = sadd.s32 %s309, 1
      %p313 = scmp.eq.s32.totalorder %s23, 3
      %p314 = scmp.ne.s32.totalorder %s309, %s311
      %p315 = scmp.eq.s32.totalorder %s23, 0
      %p316 = por %p314, %p315
      %p317 = scmp.ne.s32.totalorder %s309, %s311
      %p318 = scmp.eq.s32.totalorder %s28, 3
      %p319 = por %p317, %p318
      %p320 = scmp.ne.s32.totalorder %s311, %s312
      %p321 = scmp.eq.s32.totalorder %s28, 0
      %p322 = por %p320, %p321
      %p323 = scmp.ne.s32.totalorder %s311, %s312
      %p324 = scmp.eq.s32.totalorder %s29, 3
      %p325 = por %p323, %p324
      %p327 = scmp.ne.s32.totalorder %s312, %s326
      %p328 = scmp.eq.s32.totalorder %s29, 0
      %p329 = por %p327, %p328
      %s331 = sadd.s32 %s330, 1
      %p334 = scmp.eq.s32.totalorder %s23, 3
      %p335 = scmp.ne.s32.totalorder %s330, %s332
      %p336 = scmp.eq.s32.totalorder %s23, 0
      %p337 = por %p335, %p336
      %p338 = scmp.ne.s32.totalorder %s330, %s332
      %p339 = scmp.eq.s32.totalorder %s28, 3
      %p340 = por %p338, %p339
      %p341 = scmp.ne.s32.totalorder %s332, %s333
      %p342 = scmp.eq.s32.totalorder %s28, 0
      %p343 = por %p341, %p342
      %p344 = scmp.ne.s32.totalorder %s332, %s333
      %p345 = scmp.eq.s32.totalorder %s29, 3
      %p346 = por %p344, %p345
      %p348 = scmp.ne.s32.totalorder %s333, %s347
      %p349 = scmp.eq.s32.totalorder %s29, 0
      %p350 = por %p348, %p349
      %p351 = scmp.le.s32.totalorder 1, %s23
      %p352 = scmp.lt.s32.totalorder %s23, 5
      %p353 = pnand %p351, %p352
      %p354 = pneg %p353
      // Predicated region
      $region9: #{encoder_forward.1} parent=5 // pred_check
        _
      $region10: #{encoder_forward.1} parent=5 // pred_check_branch
        %356 = sbr.rel (%p353) target = $region12
      $region11: #{encoder_forward.1} parent=5 // pred_region
        %s357 = ssub.s32 %s23, 1
        // Predicated region
        $region13: #{encoder_forward.1} parent=11 // pred_check
          %p358 = pneg %p44
        $region14: #{encoder_forward.1} parent=11 // pred_check_branch
          %360 = sbr.rel (%p358) target = $region16
        $region15: #{encoder_forward.1} parent=11 // pred_region
          _
        $region16: #{encoder_forward.1} parent=11 // pred_fallthru
          _
        // Predicated region
        $region17: #{encoder_forward.1} parent=11 // pred_check
          %p361 = pneg %p65
        $region18: #{encoder_forward.1} parent=11 // pred_check_branch
          %363 = sbr.rel (%p361) target = $region20
        $region19: #{encoder_forward.1} parent=11 // pred_region
          _
        $region20: #{encoder_forward.1} parent=11 // pred_fallthru
          _
        // Predicated region
        $region21: #{encoder_forward.1} parent=11 // pred_check
          %p364 = pneg %p86
        $region22: #{encoder_forward.1} parent=11 // pred_check_branch
          %366 = sbr.rel (%p364) target = $region24
        $region23: #{encoder_forward.1} parent=11 // pred_region
          %s368 = ssub.s32 1536, 1536
          %369 = vsyncadd [#allocation5], %s368
          %s370 = sshll.u32 [#allocation4], 4
          %s371 = int_to_ptr.vmem [resolvable:$true] %s370
          %376 = dma.hbm_to_vmem [thread:$0]  %s2, 1536, %s371, [#allocation5], 64, 64, 4
        $region24: #{encoder_forward.1} parent=11 // pred_fallthru
          _
        // Predicated region
        $region25: #{encoder_forward.1} parent=11 // pred_check
          %p377 = pneg %p107
        $region26: #{encoder_forward.1} parent=11 // pred_check_branch
          %379 = sbr.rel (%p377) target = $region28
        $region27: #{encoder_forward.1} parent=11 // pred_region
          _
        $region28: #{encoder_forward.1} parent=11 // pred_fallthru
          _
        // Predicated region
        $region29: #{encoder_forward.1} parent=11 // pred_check
          %p380 = pneg %p128
        $region30: #{encoder_forward.1} parent=11 // pred_check_branch
          %382 = sbr.rel (%p380) target = $region32
        $region31: #{encoder_forward.1} parent=11 // pred_region
          _
        $region32: #{encoder_forward.1} parent=11 // pred_fallthru
          _
        // Predicated region
        $region33: #{encoder_forward.1} parent=11 // pred_check
          %p383 = pneg %p149
        $region34: #{encoder_forward.1} parent=11 // pred_check_branch
          %385 = sbr.rel (%p383) target = $region36
        $region35: #{encoder_forward.1} parent=11 // pred_region
          _
        $region36: #{encoder_forward.1} parent=11 // pred_fallthru
          _
        // Predicated region
        $region37: #{encoder_forward.1} parent=11 // pred_check
          %p386 = pneg %p170
        $region38: #{encoder_forward.1} parent=11 // pred_check_branch
          %388 = sbr.rel (%p386) target = $region40
        $region39: #{encoder_forward.1} parent=11 // pred_region
          _
        $region40: #{encoder_forward.1} parent=11 // pred_fallthru
          _
        // Predicated region
        $region41: #{encoder_forward.1} parent=11 // pred_check
          %p389 = pneg %p191
        $region42: #{encoder_forward.1} parent=11 // pred_check_branch
          %391 = sbr.rel (%p389) target = $region44
        $region43: #{encoder_forward.1} parent=11 // pred_region
          _
        $region44: #{encoder_forward.1} parent=11 // pred_fallthru
          _
        // Predicated region
        $region45: #{encoder_forward.1} parent=11 // pred_check
          %p392 = pneg %p212
        $region46: #{encoder_forward.1} parent=11 // pred_check_branch
          %394 = sbr.rel (%p392) target = $region48
        $region47: #{encoder_forward.1} parent=11 // pred_region
          _
        $region48: #{encoder_forward.1} parent=11 // pred_fallthru
          _
        // Predicated region
        $region49: #{encoder_forward.1} parent=11 // pred_check
          %p395 = pneg %p233
        $region50: #{encoder_forward.1} parent=11 // pred_check_branch
          %397 = sbr.rel (%p395) target = $region52
        $region51: #{encoder_forward.1} parent=11 // pred_region
          %s399 = ssub.s32 512, 512
          %400 = vsyncadd [#allocation8], %s399
          %s401 = sshll.u32 [#allocation7], 4
          %s402 = int_to_ptr.vmem [resolvable:$true] %s401
          %407 = dma.hbm_to_vmem [thread:$0]  %s9, 512, %s402, [#allocation8], 128, 128, 8
        $region52: #{encoder_forward.1} parent=11 // pred_fallthru
          _
        // Predicated region
        $region53: #{encoder_forward.1} parent=11 // pred_check
          %p408 = pneg %p280
        $region54: #{encoder_forward.1} parent=11 // pred_check_branch
          %410 = sbr.rel (%p408) target = $region56
        $region55: #{encoder_forward.1} parent=11 // pred_region
          _
        $region56: #{encoder_forward.1} parent=11 // pred_fallthru
          _
        // Predicated region
        $region57: #{encoder_forward.1} parent=11 // pred_check
          %p411 = pneg %p301
        $region58: #{encoder_forward.1} parent=11 // pred_check_branch
          %413 = sbr.rel (%p411) target = $region60
        $region59: #{encoder_forward.1} parent=11 // pred_region
          %s415 = ssub.s32 4096, 4096
          %416 = vsyncadd [#allocation8], %s415
          %s417 = sshll.u32 [#allocation9], 4
          %s418 = int_to_ptr.vmem [resolvable:$true] %s417
          %423 = dma.hbm_to_vmem [thread:$0]  %s12, 4096, %s418, [#allocation8], 64, 64, 4
        $region60: #{encoder_forward.1} parent=11 // pred_fallthru
          _
        // Predicated region
        $region61: #{encoder_forward.1} parent=11 // pred_check
          %p424 = pneg %p322
        $region62: #{encoder_forward.1} parent=11 // pred_check_branch
          %426 = sbr.rel (%p424) target = $region64
        $region63: #{encoder_forward.1} parent=11 // pred_region
          _
        $region64: #{encoder_forward.1} parent=11 // pred_fallthru
          _
      $region12: #{encoder_forward.1} parent=5 // pred_fallthru
        _
      %p427 = scmp.lt.s32.totalorder %s23, 4
      // Predicated region
      $region65: #{encoder_forward.1} parent=5 // pred_check
        %p428 = pneg %p427
      $region66: #{encoder_forward.1} parent=5 // pred_check_branch
        %430 = sbr.rel (%p428) target = $region68
      $region67: #{encoder_forward.1} parent=5 // pred_region
        // Predicated region
        $region69: #{encoder_forward.1} parent=67 // pred_check
          %p431 = pneg %p253
        $region70: #{encoder_forward.1} parent=67 // pred_check_branch
          %433 = sbr.rel (%p431) target = $region72
        $region71: #{encoder_forward.1} parent=67 // pred_region
          %s434 = smul.u32 16, %s23
          %p435 = scmp.lt.s32.totalorder %s434, 63
          %s436 = scalar_select %p435, %s434, 63
          %s437 = smul.addr %s436, 4
          %s438 = smul.addr %s437, 4
          %s439 = scalar_lea.vmem %s10, %s438
          %s440 = smul.u32 16, %s23
        $region72: #{encoder_forward.1} parent=67 // pred_fallthru
          _
      $region68: #{encoder_forward.1} parent=5 // pred_fallthru
        _
      %p441 = scmp.le.s32.totalorder 1, %s23
      %p442 = scmp.lt.s32.totalorder %s23, 5
      %p443 = pnand %p441, %p442
      %p444 = pneg %p443
      // Predicated region
      $region73: #{encoder_forward.1} parent=5 // pred_check
        _
      $region74: #{encoder_forward.1} parent=5 // pred_check_branch
        %446 = sbr.rel (%p443) target = $region76
      $region75: #{encoder_forward.1} parent=5 // pred_region
        %s447 = ssub.s32 %s23, 1
        // Predicated region
        $region77: #{encoder_forward.1} parent=75 // pred_check
          %p448 = pneg %p86
        $region78: #{encoder_forward.1} parent=75 // pred_check_branch
          %450 = sbr.rel (%p448) target = $region80
        $region79: #{encoder_forward.1} parent=75 // pred_region
          %451 = dma.done [#allocation5], 1536
        $region80: #{encoder_forward.1} parent=75 // pred_fallthru
          _
        // Predicated region
        $region81: #{encoder_forward.1} parent=75 // pred_check
          %p452 = pneg %p233
        $region82: #{encoder_forward.1} parent=75 // pred_check_branch
          %454 = sbr.rel (%p452) target = $region84
        $region83: #{encoder_forward.1} parent=75 // pred_region
          %455 = dma.done [#allocation8], 512
        $region84: #{encoder_forward.1} parent=75 // pred_fallthru
          _
        // Predicated region
        $region85: #{encoder_forward.1} parent=75 // pred_check
          %p456 = pneg %p301
        $region86: #{encoder_forward.1} parent=75 // pred_check_branch
          %458 = sbr.rel (%p456) target = $region88
        $region87: #{encoder_forward.1} parent=75 // pred_region
          %459 = dma.done [#allocation8], 4096
        $region88: #{encoder_forward.1} parent=75 // pred_fallthru
          _
        %p460 = pneg %p44
        %p461 = pneg %p41
        %p462 = pneg %p65
        %p463 = pneg %p62
        %p464 = pneg %p86
        %p465 = pneg %p83
        %p466 = pneg %p107
        %p467 = pneg %p104
        %p468 = pneg %p128
        %p469 = pneg %p125
        %p470 = pneg %p149
        %p471 = pneg %p146
        %p472 = pneg %p170
        %p473 = pneg %p167
        %p474 = pneg %p191
        %p475 = pneg %p188
        %p476 = pneg %p212
        %p477 = pneg %p209
        %p478 = pneg %p233
        %p479 = pneg %p230
        %s480 = smul.u32 16, %s28
        %p481 = scmp.lt.s32.totalorder %s480, 63
        %s482 = scalar_select %p481, %s480, 63
        %s483 = smul.addr %s482, 4
        %s484 = smul.addr %s483, 4
        %s485 = scalar_lea.vmem %s10, %s484
        %p486 = pneg %p259
        %p487 = pneg %p256
        %p488 = pneg %p280
        %p489 = pneg %p277
        %p490 = pneg %p301
        %p491 = pneg %p298
        %p492 = pneg %p322
        %p493 = pneg %p319
        %p494 = pneg %p343
        %p495 = pneg %p340
        %s496 = smul.u32 16, %s28
        %p497 = scmp.lt.s32.totalorder %s496, 63
        %s498 = scalar_select %p497, %s496, 63
        %s499 = smul.addr %s498, 4
        %s500 = smul.addr %s499, 4
        %s501 = scalar_lea.vmem %s10, %s500
        %s502 = smul.u32 16, %s28
        %p504 = scmp.eq.s32.totalorder %s28, 0
        // Predicated region
        $region89: #{encoder_forward.1} parent=75 // pred_check
          %p505 = pneg %p504
        $region90: #{encoder_forward.1} parent=75 // pred_check_branch
          %507 = sbr.rel (%p505) target = $region92
        $region91: #{encoder_forward.1} parent=75 // pred_region
          %v508 = vld [vmem:[%s0] sm:$0xff]
          %v509 = vld [vmem:[%s0 + $0x8] sm:$0xff]
          %v510 = vld [vmem:[#allocation4] sm:$0xf]
          %v511 = vld [vmem:[#allocation4 + $0x4] sm:$0xf]
          %v512 = vld [vmem:[#allocation4 + $0x8] sm:$0xf]
          %v513 = vld [vmem:[#allocation4 + $0xc] sm:$0xf]
          %v514 = vld [vmem:[#allocation4 + $0x10] sm:$0xf]
          %v515 = vld [vmem:[#allocation4 + $0x14] sm:$0xf]
          %v516 = vld [vmem:[#allocation4 + $0x18] sm:$0xf]
          %v517 = vld [vmem:[#allocation4 + $0x1c] sm:$0xf]
          %v518 = vld [vmem:[#allocation4 + $0x20] sm:$0xf]
          %v519 = vld [vmem:[#allocation4 + $0x24] sm:$0xf]
          %v520 = vld [vmem:[#allocation4 + $0x28] sm:$0xf]
          %v521 = vld [vmem:[#allocation4 + $0x2c] sm:$0xf]
          %v522 = vld [vmem:[#allocation4 + $0x30] sm:$0xf]
          %v523 = vld [vmem:[#allocation4 + $0x34] sm:$0xf]
          %v524 = vld [vmem:[#allocation4 + $0x38] sm:$0xf]
          %v525 = vld [vmem:[#allocation4 + $0x3c] sm:$0xf]
          %v526 = vld [vmem:[#allocation4 + $0x40] sm:$0xf]
          %v527 = vld [vmem:[#allocation4 + $0x44] sm:$0xf]
          %v528 = vld [vmem:[#allocation4 + $0x48] sm:$0xf]
          %v529 = vld [vmem:[#allocation4 + $0x4c] sm:$0xf]
          %v530 = vld [vmem:[#allocation4 + $0x50] sm:$0xf]
          %v531 = vld [vmem:[#allocation4 + $0x54] sm:$0xf]
          %v532 = vld [vmem:[#allocation4 + $0x58] sm:$0xf]
          %v533 = vld [vmem:[#allocation4 + $0x5c] sm:$0xf]
          %v534 = vld [vmem:[%s3] sm:$0x1]
          %v536 = vlaneseq
          %v537 = vshrl.u32 %v536, 7
          %v538 = vsub.s32 0, %v537
          %v539 = vrot.slane %v534, %v538
          %v543 = vunpack.c.l.b16 %v508
          %v544 = vunpack.c.h.b16 %v508
          %v545 = vunpack.c.l.b16 %v509
          %v546 = vunpack.c.h.b16 %v509
          %v547 = vpack.c.b16 %v545, %v543
          %v548 = vpack.c.b16 %v546, %v544
          %v574 = vunpack.c.l.b16 %v510
          %v575 = vunpack.c.l.b16 %v511
          %v576 = vunpack.c.l.b16 %v512
          %v577 = vunpack.c.l.b16 %v513
          %v578 = vunpack.c.l.b16 %v514
          %v579 = vunpack.c.l.b16 %v515
          %v580 = vunpack.c.l.b16 %v516
          %v581 = vunpack.c.l.b16 %v517
          %v582 = vunpack.c.l.b16 %v518
          %v583 = vunpack.c.l.b16 %v519
          %v584 = vunpack.c.l.b16 %v520
          %v585 = vunpack.c.l.b16 %v521
          %v586 = vunpack.c.l.b16 %v522
          %v587 = vunpack.c.l.b16 %v523
          %v588 = vunpack.c.l.b16 %v524
          %v589 = vunpack.c.l.b16 %v525
          %v590 = vunpack.c.l.b16 %v526
          %v591 = vunpack.c.l.b16 %v527
          %v592 = vunpack.c.l.b16 %v528
          %v593 = vunpack.c.l.b16 %v529
          %v594 = vunpack.c.l.b16 %v530
          %v595 = vunpack.c.l.b16 %v531
          %v596 = vunpack.c.l.b16 %v532
          %v597 = vunpack.c.l.b16 %v533
          %v598 = vpack.c.b16 %v575, %v574
          %v599 = vpack.c.b16 %v577, %v576
          %v600 = vpack.c.b16 %v579, %v578
          %v601 = vpack.c.b16 %v581, %v580
          %v602 = vpack.c.b16 %v583, %v582
          %v603 = vpack.c.b16 %v585, %v584
          %v604 = vpack.c.b16 %v587, %v586
          %v605 = vpack.c.b16 %v589, %v588
          %v606 = vpack.c.b16 %v591, %v590
          %v607 = vpack.c.b16 %v593, %v592
          %v608 = vpack.c.b16 %v595, %v594
          %v609 = vpack.c.b16 %v597, %v596
          %vm622 = vcmask 523264
          %v624 = vsel %vm622, %v548, 0
          %626 = vmatprep.subr.bf16.mxu0 0
          %627 = vmatpush1.bf16.msra.mxu0 %v605
          %628 = vmatprep.subr.bf16.mxu0 0
          %629 = vmatpush1.bf16.msra.mxu0 %v604
          %630 = vmatprep.subr.bf16.mxu0 0
          %631 = vmatpush1.bf16.msra.mxu0 %v603
          %632 = vmatprep.subr.bf16.mxu0 0
          %633 = vmatpush1.bf16.msra.mxu0 %v602
          %634 = vmatprep.subr.bf16.mxu0 0
          %635 = vmatpush1.bf16.msra.mxu0 %v601
          %636 = vmatprep.subr.bf16.mxu0 0
          %637 = vmatpush1.bf16.msra.mxu0 %v600
          %638 = vmatprep.subr.bf16.mxu0 0
          %639 = vmatpush1.bf16.msra.mxu0 %v599
          %640 = vmatprep.subr.bf16.mxu0 0
          %641 = vmatpush1.bf16.msra.mxu0 %v598
          %642 = vmatprep.subr.bf16.mxu0 0
          %643 = vmatpush2.bf16.msra.mxu0 0
          %644 = vmatprep.subr.bf16.mxu0 0
          %645 = vmatpush2.bf16.msra.mxu0 0
          %646 = vmatprep.subr.bf16.mxu0 0
          %647 = vmatpush2.bf16.msra.mxu0 0
          %648 = vmatprep.subr.bf16.mxu0 0
          %649 = vmatpush2.bf16.msra.mxu0 0
          %650 = vmatprep.subr.bf16.mxu0 0
          %651 = vmatpush2.bf16.msra.mxu0 %v609
          %652 = vmatprep.subr.bf16.mxu0 0
          %653 = vmatpush2.bf16.msra.mxu0 %v608
          %654 = vmatprep.subr.bf16.mxu0 0
          %655 = vmatpush2.bf16.msra.mxu0 %v607
          %656 = vmatprep.subr.bf16.mxu0 0
          %657 = vmatpush2.bf16.msra.mxu0 %v606
          %658 = vmatprep.mubr.bf16.mxu0 %v624
          %659 = vmatmul.mubr.bf16.gmra.mxu0 %v547
          %v660 = vpop.f32.mrf.mxu0
          %v661 = vadd.f32 %v539, %v660
          %v662 = vpop.f32.mrf.mxu0
          %v663 = vpop.f32.mrf.mxu0
          %v664 = vadd.f32 %v539, %v663
          %v665 = vpop.f32.mrf.mxu0
          %666 = vdwg.mxu0
          %vm667 = vcmp.ge.f32.partialorder %v661, 0.0
          %vm668 = vcmp.ge.f32.partialorder %v664, 0.0
          %v669 = vmul.f32 %v661, 0.2
          %v670 = vmul.f32 %v664, 0.2
          %v671 = vsel %vm667, %v661, %v669
          %v672 = vsel %vm668, %v664, %v670
          %v673 = vpack.c.bf16 %v672, %v671
          %s674 = scalar_lea.vmem %s4, 64
          %v675 = vld [vmem:[%s674] sm:$0xf]
          %v676 = vld [vmem:[%s674 + $0x4] sm:$0xf]
          %v677 = vld [vmem:[%s674 + $0x8] sm:$0xf]
          %v678 = vld [vmem:[%s674 + $0xc] sm:$0xf]
          %v679 = vld [vmem:[%s674 + $0x10] sm:$0xf]
          %v680 = vld [vmem:[%s674 + $0x14] sm:$0xf]
          %v681 = vld [vmem:[%s674 + $0x18] sm:$0xf]
          %v682 = vld [vmem:[%s674 + $0x1c] sm:$0xf]
          %v683 = vld [vmem:[%s674 + $0x20] sm:$0xf]
          %v684 = vld [vmem:[%s674 + $0x24] sm:$0xf]
          %v685 = vld [vmem:[%s674 + $0x28] sm:$0xf]
          %v686 = vld [vmem:[%s674 + $0x2c] sm:$0xf]
          %v687 = vld [vmem:[%s674 + $0x30] sm:$0xf]
          %v688 = vld [vmem:[%s674 + $0x34] sm:$0xf]
          %v689 = vld [vmem:[%s674 + $0x38] sm:$0xf]
          %v690 = vld [vmem:[%s674 + $0x3c] sm:$0xf]
          %s691 = scalar_lea.vmem %s4, 128
          %v692 = vld [vmem:[%s691] sm:$0xf]
          %v693 = vld [vmem:[%s691 + $0x4] sm:$0xf]
          %v694 = vld [vmem:[%s691 + $0x8] sm:$0xf]
          %v695 = vld [vmem:[%s691 + $0xc] sm:$0xf]
          %v696 = vld [vmem:[%s691 + $0x10] sm:$0xf]
          %v697 = vld [vmem:[%s691 + $0x14] sm:$0xf]
          %v698 = vld [vmem:[%s691 + $0x18] sm:$0xf]
          %v699 = vld [vmem:[%s691 + $0x1c] sm:$0xf]
          %v700 = vld [vmem:[%s691 + $0x20] sm:$0xf]
          %v701 = vld [vmem:[%s691 + $0x24] sm:$0xf]
          %v702 = vld [vmem:[%s691 + $0x28] sm:$0xf]
          %v703 = vld [vmem:[%s691 + $0x2c] sm:$0xf]
          %v704 = vld [vmem:[%s691 + $0x30] sm:$0xf]
          %v705 = vld [vmem:[%s691 + $0x34] sm:$0xf]
          %v706 = vld [vmem:[%s691 + $0x38] sm:$0xf]
          %v707 = vld [vmem:[%s691 + $0x3c] sm:$0xf]
          %v709 = vrot.slane %v673, 4
          %v727 = vunpack.c.l.b16 %v692
          %v728 = vunpack.c.l.b16 %v693
          %v729 = vunpack.c.l.b16 %v694
          %v730 = vunpack.c.l.b16 %v695
          %v731 = vunpack.c.l.b16 %v696
          %v732 = vunpack.c.l.b16 %v697
          %v733 = vunpack.c.l.b16 %v698
          %v734 = vunpack.c.l.b16 %v699
          %v735 = vunpack.c.l.b16 %v700
          %v736 = vunpack.c.l.b16 %v701
          %v737 = vunpack.c.l.b16 %v702
          %v738 = vunpack.c.l.b16 %v703
          %v739 = vunpack.c.l.b16 %v704
          %v740 = vunpack.c.l.b16 %v705
          %v741 = vunpack.c.l.b16 %v706
          %v742 = vunpack.c.l.b16 %v707
          %v743 = vpack.c.b16 %v728, %v727
          %v744 = vpack.c.b16 %v730, %v729
          %v745 = vpack.c.b16 %v732, %v731
          %v746 = vpack.c.b16 %v734, %v733
          %v747 = vpack.c.b16 %v736, %v735
          %v748 = vpack.c.b16 %v738, %v737
          %v749 = vpack.c.b16 %v740, %v739
          %v750 = vpack.c.b16 %v742, %v741
          %759 = vmatprep.subr.bf16.mxu0 0
          %760 = vmatpush1.bf16.msra.mxu0 %v750
          %761 = vmatprep.subr.bf16.mxu0 0
          %762 = vmatpush1.bf16.msra.mxu0 %v749
          %763 = vmatprep.subr.bf16.mxu0 0
          %764 = vmatpush1.bf16.msra.mxu0 %v748
          %765 = vmatprep.subr.bf16.mxu0 0
          %766 = vmatpush1.bf16.msra.mxu0 %v747
          %767 = vmatprep.subr.bf16.mxu0 0
          %768 = vmatpush1.bf16.msra.mxu0 %v746
          %769 = vmatprep.subr.bf16.mxu0 0
          %770 = vmatpush1.bf16.msra.mxu0 %v745
          %771 = vmatprep.subr.bf16.mxu0 0
          %772 = vmatpush1.bf16.msra.mxu0 %v744
          %773 = vmatprep.subr.bf16.mxu0 0
          %774 = vmatpush1.bf16.msra.mxu0 %v743
          %775 = vmatprep.subr.bf16.mxu0 0
          %776 = vmatpush2.bf16.msra.mxu0 0
          %777 = vmatprep.subr.bf16.mxu0 0
          %778 = vmatpush2.bf16.msra.mxu0 0
          %779 = vmatprep.subr.bf16.mxu0 0
          %780 = vmatpush2.bf16.msra.mxu0 0
          %781 = vmatprep.subr.bf16.mxu0 0
          %782 = vmatpush2.bf16.msra.mxu0 0
          %783 = vmatprep.subr.bf16.mxu0 0
          %784 = vmatpush2.bf16.msra.mxu0 0
          %785 = vmatprep.subr.bf16.mxu0 0
          %786 = vmatpush2.bf16.msra.mxu0 0
          %787 = vmatprep.subr.bf16.mxu0 0
          %788 = vmatpush2.bf16.msra.mxu0 0
          %789 = vmatprep.subr.bf16.mxu0 0
          %790 = vmatpush2.bf16.msra.mxu0 0
          %791 = vmatprep.mubr.bf16.mxu0 0
          %792 = vmatmul.mubr.bf16.gmra.mxu0 %v709
          %v793 = vpop.f32.mrf.mxu0
          %v794 = vadd.f32 0.0, %v793
          %v795 = vpop.f32.mrf.mxu0
          %v796 = vpop.f32.mrf.mxu0
          %v797 = vpop.f32.mrf.mxu0
          %798 = vdwg.mxu0
          %v799 = vld [vmem:[%s4] sm:$0xf]
          %v800 = vld [vmem:[%s4 + $0x4] sm:$0xf]
          %v801 = vld [vmem:[%s4 + $0x8] sm:$0xf]
          %v802 = vld [vmem:[%s4 + $0xc] sm:$0xf]
          %v803 = vld [vmem:[%s4 + $0x10] sm:$0xf]
          %v804 = vld [vmem:[%s4 + $0x14] sm:$0xf]
          %v805 = vld [vmem:[%s4 + $0x18] sm:$0xf]
          %v806 = vld [vmem:[%s4 + $0x1c] sm:$0xf]
          %v807 = vld [vmem:[%s4 + $0x20] sm:$0xf]
          %v808 = vld [vmem:[%s4 + $0x24] sm:$0xf]
          %v809 = vld [vmem:[%s4 + $0x28] sm:$0xf]
          %v810 = vld [vmem:[%s4 + $0x2c] sm:$0xf]
          %v811 = vld [vmem:[%s4 + $0x30] sm:$0xf]
          %v812 = vld [vmem:[%s4 + $0x34] sm:$0xf]
          %v813 = vld [vmem:[%s4 + $0x38] sm:$0xf]
          %v814 = vld [vmem:[%s4 + $0x3c] sm:$0xf]
          %v831 = vunpack.c.l.b16 %v799
          %v832 = vunpack.c.l.b16 %v800
          %v833 = vunpack.c.l.b16 %v801
          %v834 = vunpack.c.l.b16 %v802
          %v835 = vunpack.c.l.b16 %v803
          %v836 = vunpack.c.l.b16 %v804
          %v837 = vunpack.c.l.b16 %v805
          %v838 = vunpack.c.l.b16 %v806
          %v839 = vunpack.c.l.b16 %v807
          %v840 = vunpack.c.l.b16 %v808
          %v841 = vunpack.c.l.b16 %v809
          %v842 = vunpack.c.l.b16 %v810
          %v843 = vunpack.c.l.b16 %v811
          %v844 = vunpack.c.l.b16 %v812
          %v845 = vunpack.c.l.b16 %v813
          %v846 = vunpack.c.l.b16 %v814
          %v847 = vpack.c.b16 %v832, %v831
          %v848 = vpack.c.b16 %v834, %v833
          %v849 = vpack.c.b16 %v836, %v835
          %v850 = vpack.c.b16 %v838, %v837
          %v851 = vpack.c.b16 %v840, %v839
          %v852 = vpack.c.b16 %v842, %v841
          %v853 = vpack.c.b16 %v844, %v843
          %v854 = vpack.c.b16 %v846, %v845
          %863 = vmatprep.subr.bf16.mxu0 0
          %864 = vmatpush1.bf16.msra.mxu0 %v854
          %865 = vmatprep.subr.bf16.mxu0 0
          %866 = vmatpush1.bf16.msra.mxu0 %v853
          %867 = vmatprep.subr.bf16.mxu0 0
          %868 = vmatpush1.bf16.msra.mxu0 %v852
          %869 = vmatprep.subr.bf16.mxu0 0
          %870 = vmatpush1.bf16.msra.mxu0 %v851
          %871 = vmatprep.subr.bf16.mxu0 0
          %872 = vmatpush1.bf16.msra.mxu0 %v850
          %873 = vmatprep.subr.bf16.mxu0 0
          %874 = vmatpush1.bf16.msra.mxu0 %v849
          %875 = vmatprep.subr.bf16.mxu0 0
          %876 = vmatpush1.bf16.msra.mxu0 %v848
          %877 = vmatprep.subr.bf16.mxu0 0
          %878 = vmatpush1.bf16.msra.mxu0 %v847
          %879 = vmatprep.subr.bf16.mxu0 0
          %880 = vmatpush2.bf16.msra.mxu0 0
          %881 = vmatprep.subr.bf16.mxu0 0
          %882 = vmatpush2.bf16.msra.mxu0 0
          %883 = vmatprep.subr.bf16.mxu0 0
          %884 = vmatpush2.bf16.msra.mxu0 0
          %885 = vmatprep.subr.bf16.mxu0 0
          %886 = vmatpush2.bf16.msra.mxu0 0
          %887 = vmatprep.subr.bf16.mxu0 0
          %888 = vmatpush2.bf16.msra.mxu0 0
          %889 = vmatprep.subr.bf16.mxu0 0
          %890 = vmatpush2.bf16.msra.mxu0 0
          %891 = vmatprep.subr.bf16.mxu0 0
          %892 = vmatpush2.bf16.msra.mxu0 0
          %893 = vmatprep.subr.bf16.mxu0 0
          %894 = vmatpush2.bf16.msra.mxu0 0
          %895 = vmatprep.mubr.bf16.mxu0 0
          %896 = vmatmul.mubr.bf16.gmra.mxu0 %v709
          %v897 = vpop.f32.mrf.mxu0
          %v898 = vadd.f32 0.0, %v897
          %v899 = vpop.f32.mrf.mxu0
          %v900 = vpop.f32.mrf.mxu0
          %v901 = vpop.f32.mrf.mxu0
          %902 = vdwg.mxu0
          %v903 = vld [vmem:[%s1] sm:$0xff]
          %vm904 = vcmask 64512
          %v906 = vsel %vm904, %v903, 0
          %908 = vmatprep.subr.mxu0 0.0
          %909 = vmatpush1.msra.mxu0 0.0
          %910 = vmatprep.subr.mxu0 0.0
          %911 = vmatpush1.msra.mxu0 0.0
          %912 = vmatprep.subr.mxu0 0.0
          %913 = vmatpush1.msra.mxu0 0.0
          %914 = vmatprep.subr.mxu0 0.0
          %915 = vmatpush1.msra.mxu0 0.0
          %916 = vmatprep.subr.mxu0 0.0
          %917 = vmatpush1.msra.mxu0 0.0
          %918 = vmatprep.subr.mxu0 0.0
          %919 = vmatpush1.msra.mxu0 0.0
          %920 = vmatprep.subr.mxu0 0.0
          %921 = vmatpush1.msra.mxu0 0.0
          %922 = vmatprep.subr.mxu0 0.0
          %923 = vmatpush1.msra.mxu0 0.0
          %924 = vmatprep.subr.mxu0 0.0
          %925 = vmatpush1.msra.mxu0 0.0
          %926 = vmatprep.subr.mxu0 0.0
          %927 = vmatpush1.msra.mxu0 0.0
          %928 = vmatprep.subr.mxu0 0.0
          %929 = vmatpush1.msra.mxu0 0.0
          %930 = vmatprep.subr.mxu0 0.0
          %931 = vmatpush1.msra.mxu0 0.0
          %932 = vmatprep.subr.mxu0 0.0
          %933 = vmatpush1.msra.mxu0 0.0
          %934 = vmatprep.subr.mxu0 0.0
          %935 = vmatpush1.msra.mxu0 0.0
          %936 = vmatprep.subr.mxu0 0.0
          %937 = vmatpush1.msra.mxu0 0.0
          %938 = vmatprep.subr.mxu0 0.0
          %939 = vmatpush1.msra.mxu0 %v898
          %940 = vmatprep.subr.mxu0 0.0
          %941 = vmatpush2.msra.mxu0 0.0
          %942 = vmatprep.subr.mxu0 0.0
          %943 = vmatpush2.msra.mxu0 0.0
          %944 = vmatprep.subr.mxu0 0.0
          %945 = vmatpush2.msra.mxu0 0.0
          %946 = vmatprep.subr.mxu0 0.0
          %947 = vmatpush2.msra.mxu0 0.0
          %948 = vmatprep.subr.mxu0 0.0
          %949 = vmatpush2.msra.mxu0 0.0
          %950 = vmatprep.subr.mxu0 0.0
          %951 = vmatpush2.msra.mxu0 0.0
          %952 = vmatprep.subr.mxu0 0.0
          %953 = vmatpush2.msra.mxu0 0.0
          %954 = vmatprep.subr.mxu0 0.0
          %955 = vmatpush2.msra.mxu0 0.0
          %956 = vmatprep.subr.mxu0 0.0
          %957 = vmatpush2.msra.mxu0 0.0
          %958 = vmatprep.subr.mxu0 0.0
          %959 = vmatpush2.msra.mxu0 0.0
          %960 = vmatprep.subr.mxu0 0.0
          %961 = vmatpush2.msra.mxu0 0.0
          %962 = vmatprep.subr.mxu0 0.0
          %963 = vmatpush2.msra.mxu0 0.0
          %964 = vmatprep.subr.mxu0 0.0
          %965 = vmatpush2.msra.mxu0 0.0
          %966 = vmatprep.subr.mxu0 0.0
          %967 = vmatpush2.msra.mxu0 0.0
          %968 = vmatprep.subr.mxu0 0.0
          %969 = vmatpush2.msra.mxu0 0.0
          %970 = vmatprep.subr.mxu0 0.0
          %971 = vmatpush2.msra.mxu0 0.0
          %972 = vmatprep.mubr.f32.mxu0 0.0
          %973 = vmatmul.mubr.f32.gmra.mxu0 %v906
          %v974 = vpop.f32.mrf.mxu0
          %v975 = vadd.f32 0.0, %v974
          %v976 = vpop.f32.mrf.mxu0
          %977 = vdwg.mxu0
          %v994 = vunpack.c.l.b16 %v675
          %v995 = vunpack.c.l.b16 %v676
          %v996 = vunpack.c.l.b16 %v677
          %v997 = vunpack.c.l.b16 %v678
          %v998 = vunpack.c.l.b16 %v679
          %v999 = vunpack.c.l.b16 %v680
          %v1000 = vunpack.c.l.b16 %v681
          %v1001 = vunpack.c.l.b16 %v682
          %v1002 = vunpack.c.l.b16 %v683
          %v1003 = vunpack.c.l.b16 %v684
          %v1004 = vunpack.c.l.b16 %v685
          %v1005 = vunpack.c.l.b16 %v686
          %v1006 = vunpack.c.l.b16 %v687
          %v1007 = vunpack.c.l.b16 %v688
          %v1008 = vunpack.c.l.b16 %v689
          %v1009 = vunpack.c.l.b16 %v690
          %v1010 = vpack.c.b16 %v995, %v994
          %v1011 = vpack.c.b16 %v997, %v996
          %v1012 = vpack.c.b16 %v999, %v998
          %v1013 = vpack.c.b16 %v1001, %v1000
          %v1014 = vpack.c.b16 %v1003, %v1002
          %v1015 = vpack.c.b16 %v1005, %v1004
          %v1016 = vpack.c.b16 %v1007, %v1006
          %v1017 = vpack.c.b16 %v1009, %v1008
          %1026 = vmatprep.subr.bf16.mxu0 0
          %1027 = vmatpush1.bf16.msra.mxu0 %v1017
          %1028 = vmatprep.subr.bf16.mxu0 0
          %1029 = vmatpush1.bf16.msra.mxu0 %v1016
          %1030 = vmatprep.subr.bf16.mxu0 0
          %1031 = vmatpush1.bf16.msra.mxu0 %v1015
          %1032 = vmatprep.subr.bf16.mxu0 0
          %1033 = vmatpush1.bf16.msra.mxu0 %v1014
          %1034 = vmatprep.subr.bf16.mxu0 0
          %1035 = vmatpush1.bf16.msra.mxu0 %v1013
          %1036 = vmatprep.subr.bf16.mxu0 0
          %1037 = vmatpush1.bf16.msra.mxu0 %v1012
          %1038 = vmatprep.subr.bf16.mxu0 0
          %1039 = vmatpush1.bf16.msra.mxu0 %v1011
          %1040 = vmatprep.subr.bf16.mxu0 0
          %1041 = vmatpush1.bf16.msra.mxu0 %v1010
          %1042 = vmatprep.subr.bf16.mxu0 0
          %1043 = vmatpush2.bf16.msra.mxu0 0
          %1044 = vmatprep.subr.bf16.mxu0 0
          %1045 = vmatpush2.bf16.msra.mxu0 0
          %1046 = vmatprep.subr.bf16.mxu0 0
          %1047 = vmatpush2.bf16.msra.mxu0 0
          %1048 = vmatprep.subr.bf16.mxu0 0
          %1049 = vmatpush2.bf16.msra.mxu0 0
          %1050 = vmatprep.subr.bf16.mxu0 0
          %1051 = vmatpush2.bf16.msra.mxu0 0
          %1052 = vmatprep.subr.bf16.mxu0 0
          %1053 = vmatpush2.bf16.msra.mxu0 0
          %1054 = vmatprep.subr.bf16.mxu0 0
          %1055 = vmatpush2.bf16.msra.mxu0 0
          %1056 = vmatprep.subr.bf16.mxu0 0
          %1057 = vmatpush2.bf16.msra.mxu0 0
          %1058 = vmatprep.mubr.bf16.mxu0 0
          %1059 = vmatmul.mubr.bf16.gmra.mxu0 %v673
          %v1060 = vpop.f32.mrf.mxu0
          %v1061 = vadd.f32 %v794, %v1060
          %v1062 = vpop.f32.mrf.mxu0
          %v1063 = vpop.f32.mrf.mxu0
          %v1064 = vpop.f32.mrf.mxu0
          %1065 = vdwg.mxu0
          %v1066 = vadd.f32 %v1061, %v975
          %v1067 = vld [vmem:[%s5] sm:$0x1]
          %v1069 = vlaneseq
          %v1070 = vshrl.u32 %v1069, 7
          %v1071 = vsub.s32 0, %v1070
          %v1072 = vrot.slane %v1067, %v1071
          %v1074 = vadd.f32 %v1066, %v1072
          %v1075 = vrot.slane %v1074, 4
          %v1076 = vadd.f32 %v1074, %v1075
          %v1077 = vrot.slane %v1076, 2
          %v1078 = vadd.f32 %v1076, %v1077
          %v1079 = vrot.slane %v1078, 1
          %v1080 = vadd.f32 %v1078, %v1079
          %v1081 = vrcp.pop 8.0
          %v1082 = vmul.f32 %v1080, %v1081
          %v1083 = vmul.f32 %v1074, %v1074
          %v1084 = vrot.slane %v1083, 4
          %v1085 = vadd.f32 %v1083, %v1084
          %v1086 = vrot.slane %v1085, 2
          %v1087 = vadd.f32 %v1085, %v1086
          %v1088 = vrot.slane %v1087, 1
          %v1089 = vadd.f32 %v1087, %v1088
          %v1090 = vmul.f32 %v1089, %v1081
          %v1091 = vld [vmem:[%s8] sm:$0xff]
          %v1092 = vld [vmem:[%s8 + $0x8] sm:$0xff]
          %v1093 = vld [vmem:[%s8 + $0x10] sm:$0xff]
          %v1094 = vld [vmem:[%s8 + $0x18] sm:$0xff]
          %v1095 = vld [vmem:[%s8 + $0x20] sm:$0xff]
          %v1096 = vld [vmem:[%s8 + $0x28] sm:$0xff]
          %v1097 = vld [vmem:[%s8 + $0x30] sm:$0xff]
          %v1098 = vld [vmem:[%s8 + $0x38] sm:$0xff]
          %v1099 = vld [vmem:[%s8 + $0x40] sm:$0xff]
          %v1100 = vld [vmem:[%s8 + $0x48] sm:$0xff]
          %v1101 = vld [vmem:[%s8 + $0x50] sm:$0xff]
          %v1102 = vld [vmem:[%s8 + $0x58] sm:$0xff]
          %v1103 = vld [vmem:[%s8 + $0x60] sm:$0xff]
          %v1104 = vld [vmem:[%s8 + $0x68] sm:$0xff]
          %v1105 = vld [vmem:[%s8 + $0x70] sm:$0xff]
          %v1106 = vld [vmem:[%s8 + $0x78] sm:$0xff]
          %1107 = vmatprep.subr.mxu0 0.0
          %1108 = vmatpush1.msra.mxu0 %v1106
          %1109 = vmatprep.subr.mxu0 0.0
          %1110 = vmatpush1.msra.mxu0 %v1105
          %1111 = vmatprep.subr.mxu0 0.0
          %1112 = vmatpush1.msra.mxu0 %v1104
          %1113 = vmatprep.subr.mxu0 0.0
          %1114 = vmatpush1.msra.mxu0 %v1103
          %1115 = vmatprep.subr.mxu0 0.0
          %1116 = vmatpush1.msra.mxu0 %v1102
          %1117 = vmatprep.subr.mxu0 0.0
          %1118 = vmatpush1.msra.mxu0 %v1101
          %1119 = vmatprep.subr.mxu0 0.0
          %1120 = vmatpush1.msra.mxu0 %v1100
          %1121 = vmatprep.subr.mxu0 0.0
          %1122 = vmatpush1.msra.mxu0 %v1099
          %1123 = vmatprep.subr.mxu0 0.0
          %1124 = vmatpush1.msra.mxu0 %v1098
          %1125 = vmatprep.subr.mxu0 0.0
          %1126 = vmatpush1.msra.mxu0 %v1097
          %1127 = vmatprep.subr.mxu0 0.0
          %1128 = vmatpush1.msra.mxu0 %v1096
          %1129 = vmatprep.subr.mxu0 0.0
          %1130 = vmatpush1.msra.mxu0 %v1095
          %1131 = vmatprep.subr.mxu0 0.0
          %1132 = vmatpush1.msra.mxu0 %v1094
          %1133 = vmatprep.subr.mxu0 0.0
          %1134 = vmatpush1.msra.mxu0 %v1093
          %1135 = vmatprep.subr.mxu0 0.0
          %1136 = vmatpush1.msra.mxu0 %v1092
          %1137 = vmatprep.subr.mxu0 0.0
          %1138 = vmatpush1.msra.mxu0 %v1091
          %1139 = vmatprep.subr.mxu0 0.0
          %1140 = vmatpush2.msra.mxu0 0.0
          %1141 = vmatprep.subr.mxu0 0.0
          %1142 = vmatpush2.msra.mxu0 0.0
          %1143 = vmatprep.subr.mxu0 0.0
          %1144 = vmatpush2.msra.mxu0 0.0
          %1145 = vmatprep.subr.mxu0 0.0
          %1146 = vmatpush2.msra.mxu0 0.0
          %1147 = vmatprep.subr.mxu0 0.0
          %1148 = vmatpush2.msra.mxu0 0.0
          %1149 = vmatprep.subr.mxu0 0.0
          %1150 = vmatpush2.msra.mxu0 0.0
          %1151 = vmatprep.subr.mxu0 0.0
          %1152 = vmatpush2.msra.mxu0 0.0
          %1153 = vmatprep.subr.mxu0 0.0
          %1154 = vmatpush2.msra.mxu0 0.0
          %1155 = vmatprep.subr.mxu0 0.0
          %1156 = vmatpush2.msra.mxu0 0.0
          %1157 = vmatprep.subr.mxu0 0.0
          %1158 = vmatpush2.msra.mxu0 0.0
          %1159 = vmatprep.subr.mxu0 0.0
          %1160 = vmatpush2.msra.mxu0 0.0
          %1161 = vmatprep.subr.mxu0 0.0
          %1162 = vmatpush2.msra.mxu0 0.0
          %1163 = vmatprep.subr.mxu0 0.0
          %1164 = vmatpush2.msra.mxu0 0.0
          %1165 = vmatprep.subr.mxu0 0.0
          %1166 = vmatpush2.msra.mxu0 0.0
          %1167 = vmatprep.subr.mxu0 0.0
          %1168 = vmatpush2.msra.mxu0 0.0
          %1169 = vmatprep.subr.mxu0 0.0
          %1170 = vmatpush2.msra.mxu0 0.0
          %1171 = vmatprep.mubr.f32.mxu0 0.0
          %1172 = vmatmul.mubr.f32.gmra.mxu0 %v1082
          %v1173 = vpop.f32.mrf.mxu0
          %v1174 = vadd.f32 0.0, %v1173
          %v1175 = vpop.f32.mrf.mxu0
          %1176 = vdwg.mxu0
          %1177 = vmatprep.subr.mxu0 0.0
          %1178 = vmatpush1.msra.mxu0 %v1106
          %1179 = vmatprep.subr.mxu0 0.0
          %1180 = vmatpush1.msra.mxu0 %v1105
          %1181 = vmatprep.subr.mxu0 0.0
          %1182 = vmatpush1.msra.mxu0 %v1104
          %1183 = vmatprep.subr.mxu0 0.0
          %1184 = vmatpush1.msra.mxu0 %v1103
          %1185 = vmatprep.subr.mxu0 0.0
          %1186 = vmatpush1.msra.mxu0 %v1102
          %1187 = vmatprep.subr.mxu0 0.0
          %1188 = vmatpush1.msra.mxu0 %v1101
          %1189 = vmatprep.subr.mxu0 0.0
          %1190 = vmatpush1.msra.mxu0 %v1100
          %1191 = vmatprep.subr.mxu0 0.0
          %1192 = vmatpush1.msra.mxu0 %v1099
          %1193 = vmatprep.subr.mxu0 0.0
          %1194 = vmatpush1.msra.mxu0 %v1098
          %1195 = vmatprep.subr.mxu0 0.0
          %1196 = vmatpush1.msra.mxu0 %v1097
          %1197 = vmatprep.subr.mxu0 0.0
          %1198 = vmatpush1.msra.mxu0 %v1096
          %1199 = vmatprep.subr.mxu0 0.0
          %1200 = vmatpush1.msra.mxu0 %v1095
          %1201 = vmatprep.subr.mxu0 0.0
          %1202 = vmatpush1.msra.mxu0 %v1094
          %1203 = vmatprep.subr.mxu0 0.0
          %1204 = vmatpush1.msra.mxu0 %v1093
          %1205 = vmatprep.subr.mxu0 0.0
          %1206 = vmatpush1.msra.mxu0 %v1092
          %1207 = vmatprep.subr.mxu0 0.0
          %1208 = vmatpush1.msra.mxu0 %v1091
          %1209 = vmatprep.subr.mxu0 0.0
          %1210 = vmatpush2.msra.mxu0 0.0
          %1211 = vmatprep.subr.mxu0 0.0
          %1212 = vmatpush2.msra.mxu0 0.0
          %1213 = vmatprep.subr.mxu0 0.0
          %1214 = vmatpush2.msra.mxu0 0.0
          %1215 = vmatprep.subr.mxu0 0.0
          %1216 = vmatpush2.msra.mxu0 0.0
          %1217 = vmatprep.subr.mxu0 0.0
          %1218 = vmatpush2.msra.mxu0 0.0
          %1219 = vmatprep.subr.mxu0 0.0
          %1220 = vmatpush2.msra.mxu0 0.0
          %1221 = vmatprep.subr.mxu0 0.0
          %1222 = vmatpush2.msra.mxu0 0.0
          %1223 = vmatprep.subr.mxu0 0.0
          %1224 = vmatpush2.msra.mxu0 0.0
          %1225 = vmatprep.subr.mxu0 0.0
          %1226 = vmatpush2.msra.mxu0 0.0
          %1227 = vmatprep.subr.mxu0 0.0
          %1228 = vmatpush2.msra.mxu0 0.0
          %1229 = vmatprep.subr.mxu0 0.0
          %1230 = vmatpush2.msra.mxu0 0.0
          %1231 = vmatprep.subr.mxu0 0.0
          %1232 = vmatpush2.msra.mxu0 0.0
          %1233 = vmatprep.subr.mxu0 0.0
          %1234 = vmatpush2.msra.mxu0 0.0
          %1235 = vmatprep.subr.mxu0 0.0
          %1236 = vmatpush2.msra.mxu0 0.0
          %1237 = vmatprep.subr.mxu0 0.0
          %1238 = vmatpush2.msra.mxu0 0.0
          %1239 = vmatprep.subr.mxu0 0.0
          %1240 = vmatpush2.msra.mxu0 0.0
          %1241 = vmatprep.mubr.f32.mxu0 0.0
          %1242 = vmatmul.mubr.f32.gmra.mxu0 %v1090
          %v1243 = vpop.f32.mrf.mxu0
          %v1244 = vadd.f32 0.0, %v1243
          %v1245 = vpop.f32.mrf.mxu0
          %1246 = vdwg.mxu0
          %v1247 = vmul.f32 %v1174, %v1174
          %v1248 = vsub.f32 %v1244, %v1247
          %v1249 = vld [vmem:[%s6] sm:$0x1]
          %v1250 = vadd.f32 %v1248, 1e-05
          %v1251 = vrsqrt.pop %v1250
          %v1252 = vmul.f32 %v1249, %v1251
          %v1253 = vld [vmem:[%s7] sm:$0x1]
          %v1254 = vmul.f32 %v1174, %v1252
          %v1255 = vsub.f32 %v1253, %v1254
          %v1256 = vld [vmem:[#allocation7] sm:$0xff]
          %v1257 = vld [vmem:[#allocation7 + $0x8] sm:$0xff]
          %v1258 = vld [vmem:[#allocation7 + $0x10] sm:$0xff]
          %v1259 = vld [vmem:[#allocation7 + $0x18] sm:$0xff]
          %vm1260 = vcmask 261120
          %v1262 = vsel %vm1260, %v1252, 0
          %1264 = vmatprep.subr.mxu0 0.0
          %1265 = vmatpush1.msra.mxu0 0.0
          %1266 = vmatprep.subr.mxu0 0.0
          %1267 = vmatpush1.msra.mxu0 0.0
          %1268 = vmatprep.subr.mxu0 0.0
          %1269 = vmatpush1.msra.mxu0 0.0
          %1270 = vmatprep.subr.mxu0 0.0
          %1271 = vmatpush1.msra.mxu0 0.0
          %1272 = vmatprep.subr.mxu0 0.0
          %1273 = vmatpush1.msra.mxu0 0.0
          %1274 = vmatprep.subr.mxu0 0.0
          %1275 = vmatpush1.msra.mxu0 0.0
          %1276 = vmatprep.subr.mxu0 0.0
          %1277 = vmatpush1.msra.mxu0 0.0
          %1278 = vmatprep.subr.mxu0 0.0
          %1279 = vmatpush1.msra.mxu0 0.0
          %1280 = vmatprep.subr.mxu0 0.0
          %1281 = vmatpush1.msra.mxu0 0.0
          %1282 = vmatprep.subr.mxu0 0.0
          %1283 = vmatpush1.msra.mxu0 0.0
          %1284 = vmatprep.subr.mxu0 0.0
          %1285 = vmatpush1.msra.mxu0 0.0
          %1286 = vmatprep.subr.mxu0 0.0
          %1287 = vmatpush1.msra.mxu0 0.0
          %1288 = vmatprep.subr.mxu0 0.0
          %1289 = vmatpush1.msra.mxu0 %v1259
          %1290 = vmatprep.subr.mxu0 0.0
          %1291 = vmatpush1.msra.mxu0 %v1258
          %1292 = vmatprep.subr.mxu0 0.0
          %1293 = vmatpush1.msra.mxu0 %v1257
          %1294 = vmatprep.subr.mxu0 0.0
          %1295 = vmatpush1.msra.mxu0 %v1256
          %1296 = vmatprep.subr.mxu0 0.0
          %1297 = vmatpush2.msra.mxu0 0.0
          %1298 = vmatprep.subr.mxu0 0.0
          %1299 = vmatpush2.msra.mxu0 0.0
          %1300 = vmatprep.subr.mxu0 0.0
          %1301 = vmatpush2.msra.mxu0 0.0
          %1302 = vmatprep.subr.mxu0 0.0
          %1303 = vmatpush2.msra.mxu0 0.0
          %1304 = vmatprep.subr.mxu0 0.0
          %1305 = vmatpush2.msra.mxu0 0.0
          %1306 = vmatprep.subr.mxu0 0.0
          %1307 = vmatpush2.msra.mxu0 0.0
          %1308 = vmatprep.subr.mxu0 0.0
          %1309 = vmatpush2.msra.mxu0 0.0
          %1310 = vmatprep.subr.mxu0 0.0
          %1311 = vmatpush2.msra.mxu0 0.0
          %1312 = vmatprep.subr.mxu0 0.0
          %1313 = vmatpush2.msra.mxu0 0.0
          %1314 = vmatprep.subr.mxu0 0.0
          %1315 = vmatpush2.msra.mxu0 0.0
          %1316 = vmatprep.subr.mxu0 0.0
          %1317 = vmatpush2.msra.mxu0 0.0
          %1318 = vmatprep.subr.mxu0 0.0
          %1319 = vmatpush2.msra.mxu0 0.0
          %1320 = vmatprep.subr.mxu0 0.0
          %1321 = vmatpush2.msra.mxu0 0.0
          %1322 = vmatprep.subr.mxu0 0.0
          %1323 = vmatpush2.msra.mxu0 0.0
          %1324 = vmatprep.subr.mxu0 0.0
          %1325 = vmatpush2.msra.mxu0 0.0
          %1326 = vmatprep.subr.mxu0 0.0
          %1327 = vmatpush2.msra.mxu0 0.0
          %1328 = vmatprep.mubr.f32.mxu0 0.0
          %1329 = vmatmul.mubr.f32.gmra.mxu0 %v1262
          %v1330 = vpop.f32.mrf.mxu0
          %v1331 = vadd.f32 0.0, %v1330
          %v1332 = vpop.f32.mrf.mxu0
          %1333 = vdwg.mxu0
          %v1335 = vsel %vm1260, %v1255, 0
          %1337 = vmatprep.subr.mxu0 0.0
          %1338 = vmatpush1.msra.mxu0 0.0
          %1339 = vmatprep.subr.mxu0 0.0
          %1340 = vmatpush1.msra.mxu0 0.0
          %1341 = vmatprep.subr.mxu0 0.0
          %1342 = vmatpush1.msra.mxu0 0.0
          %1343 = vmatprep.subr.mxu0 0.0
          %1344 = vmatpush1.msra.mxu0 0.0
          %1345 = vmatprep.subr.mxu0 0.0
          %1346 = vmatpush1.msra.mxu0 0.0
          %1347 = vmatprep.subr.mxu0 0.0
          %1348 = vmatpush1.msra.mxu0 0.0
          %1349 = vmatprep.subr.mxu0 0.0
          %1350 = vmatpush1.msra.mxu0 0.0
          %1351 = vmatprep.subr.mxu0 0.0
          %1352 = vmatpush1.msra.mxu0 0.0
          %1353 = vmatprep.subr.mxu0 0.0
          %1354 = vmatpush1.msra.mxu0 0.0
          %1355 = vmatprep.subr.mxu0 0.0
          %1356 = vmatpush1.msra.mxu0 0.0
          %1357 = vmatprep.subr.mxu0 0.0
          %1358 = vmatpush1.msra.mxu0 0.0
          %1359 = vmatprep.subr.mxu0 0.0
          %1360 = vmatpush1.msra.mxu0 0.0
          %1361 = vmatprep.subr.mxu0 0.0
          %1362 = vmatpush1.msra.mxu0 %v1259
          %1363 = vmatprep.subr.mxu0 0.0
          %1364 = vmatpush1.msra.mxu0 %v1258
          %1365 = vmatprep.subr.mxu0 0.0
          %1366 = vmatpush1.msra.mxu0 %v1257
          %1367 = vmatprep.subr.mxu0 0.0
          %1368 = vmatpush1.msra.mxu0 %v1256
          %1369 = vmatprep.subr.mxu0 0.0
          %1370 = vmatpush2.msra.mxu0 0.0
          %1371 = vmatprep.subr.mxu0 0.0
          %1372 = vmatpush2.msra.mxu0 0.0
          %1373 = vmatprep.subr.mxu0 0.0
          %1374 = vmatpush2.msra.mxu0 0.0
          %1375 = vmatprep.subr.mxu0 0.0
          %1376 = vmatpush2.msra.mxu0 0.0
          %1377 = vmatprep.subr.mxu0 0.0
          %1378 = vmatpush2.msra.mxu0 0.0
          %1379 = vmatprep.subr.mxu0 0.0
          %1380 = vmatpush2.msra.mxu0 0.0
          %1381 = vmatprep.subr.mxu0 0.0
          %1382 = vmatpush2.msra.mxu0 0.0
          %1383 = vmatprep.subr.mxu0 0.0
          %1384 = vmatpush2.msra.mxu0 0.0
          %1385 = vmatprep.subr.mxu0 0.0
          %1386 = vmatpush2.msra.mxu0 0.0
          %1387 = vmatprep.subr.mxu0 0.0
          %1388 = vmatpush2.msra.mxu0 0.0
          %1389 = vmatprep.subr.mxu0 0.0
          %1390 = vmatpush2.msra.mxu0 0.0
          %1391 = vmatprep.subr.mxu0 0.0
          %1392 = vmatpush2.msra.mxu0 0.0
          %1393 = vmatprep.subr.mxu0 0.0
          %1394 = vmatpush2.msra.mxu0 0.0
          %1395 = vmatprep.subr.mxu0 0.0
          %1396 = vmatpush2.msra.mxu0 0.0
          %1397 = vmatprep.subr.mxu0 0.0
          %1398 = vmatpush2.msra.mxu0 0.0
          %1399 = vmatprep.subr.mxu0 0.0
          %1400 = vmatpush2.msra.mxu0 0.0
          %1401 = vmatprep.mubr.f32.mxu0 0.0
          %1402 = vmatmul.mubr.f32.gmra.mxu0 %v1335
          %v1403 = vpop.f32.mrf.mxu0
          %v1404 = vadd.f32 0.0, %v1403
          %v1405 = vpop.f32.mrf.mxu0
          %1406 = vdwg.mxu0
          %v1407 = vlaneseq
          %v1408 = vshrl.u32 %v1407, 7
          %v1409 = vsub.s32 0, %v1408
          %v1410 = vrot.slane %v1331, %v1409
          %v1411 = vmul.f32 %v1074, %v1410
          %v1412 = vlaneseq
          %v1413 = vshrl.u32 %v1412, 7
          %v1414 = vsub.s32 0, %v1413
          %v1415 = vrot.slane %v1404, %v1414
          %v1416 = vadd.f32 %v1411, %v1415
          %vm1417 = vcmp.ge.f32.partialorder %v1416, 0.0
          %v1418 = vmul.f32 %v1416, 0.2
          %v1419 = vsel %vm1417, %v1416, %v1418
          %v1421 = vcombine.high %v1419, %v1419
          %v1423 = vunpack.c.l.s4 1983009808
          %v1424 = vunpack.c.0.s8 %v1423
          %v1425 = vlaneseq
          %v1426 = vshrl.u32 %v1425, 7
          %v1427 = vsub.s32 %v1424, %v1426
          %v1428 = vrot.slane %v1419, %v1427
          %v1430 = vunpack.c.l.s4 1983009808
          %v1431 = vunpack.c.0.s8 %v1430
          %v1432 = vlaneseq
          %v1433 = vshrl.u32 %v1432, 7
          %v1434 = vsub.s32 %v1431, %v1433
          %v1435 = vrot.slane %v1421, %v1434
          %v1436 = vcombine.high %v1428, %v1428
          %v1437 = vcombine.high %v1435, %v1435
          %v1442 = vpack.c.bf16 %v1428, %v1428
          %v1443 = vpack.c.bf16 %v1436, %v1436
          %v1444 = vpack.c.bf16 %v1435, %v1435
          %v1445 = vpack.c.bf16 %v1437, %v1437
          %1446 = vst [vmem:[#allocation2] sm:$0x1] %v1442
          %1447 = vst [vmem:[#allocation2 + $0x1] sm:$0x1] %v1443
          %1448 = vst [vmem:[#allocation2 + $0x2] sm:$0x1] %v1444
          %1449 = vst [vmem:[#allocation2 + $0x3] sm:$0x1] %v1445
          %1450 = vst [vmem:[#allocation3] sm:$0xff] 0.0
        $region92: #{encoder_forward.1} parent=75 // pred_fallthru
          _
        %v1451 = vld [vmem:[#allocation3] sm:$0xff]
        %s1452 = scalar_lea.vmem [#allocation2], %s28
        %v1453 = vld [vmem:[%s1452] sm:$0x1]
        %v1454 = vld [vmem:[%s501] sm:$0xff]
        %v1455 = vld [vmem:[%s501 + $0x8] sm:$0xff]
        %v1456 = vld [vmem:[%s501 + $0x10] sm:$0xff]
        %v1457 = vld [vmem:[%s501 + $0x18] sm:$0xff]
        %v1458 = vld [vmem:[%s501 + $0x20] sm:$0xff]
        %v1459 = vld [vmem:[%s501 + $0x28] sm:$0xff]
        %v1460 = vld [vmem:[%s501 + $0x30] sm:$0xff]
        %v1461 = vld [vmem:[%s501 + $0x38] sm:$0xff]
        %v1462 = vld [vmem:[%s501 + $0x40] sm:$0xff]
        %v1463 = vld [vmem:[%s501 + $0x48] sm:$0xff]
        %v1464 = vld [vmem:[%s501 + $0x50] sm:$0xff]
        %v1465 = vld [vmem:[%s501 + $0x58] sm:$0xff]
        %v1466 = vld [vmem:[%s501 + $0x60] sm:$0xff]
        %v1467 = vld [vmem:[%s501 + $0x68] sm:$0xff]
        %v1468 = vld [vmem:[%s501 + $0x70] sm:$0xff]
        %v1469 = vld [vmem:[%s501 + $0x78] sm:$0xff]
        %v1470 = vld [vmem:[%s501 + $0x80] sm:$0xff]
        %v1471 = vld [vmem:[%s501 + $0x88] sm:$0xff]
        %v1472 = vld [vmem:[%s501 + $0x90] sm:$0xff]
        %v1473 = vld [vmem:[%s501 + $0x98] sm:$0xff]
        %v1474 = vld [vmem:[%s501 + $0xa0] sm:$0xff]
        %v1475 = vld [vmem:[%s501 + $0xa8] sm:$0xff]
        %v1476 = vld [vmem:[%s501 + $0xb0] sm:$0xff]
        %v1477 = vld [vmem:[%s501 + $0xb8] sm:$0xff]
        %v1478 = vld [vmem:[%s501 + $0xc0] sm:$0xff]
        %v1479 = vld [vmem:[%s501 + $0xc8] sm:$0xff]
        %v1480 = vld [vmem:[%s501 + $0xd0] sm:$0xff]
        %v1481 = vld [vmem:[%s501 + $0xd8] sm:$0xff]
        %v1482 = vld [vmem:[%s501 + $0xe0] sm:$0xff]
        %v1483 = vld [vmem:[%s501 + $0xe8] sm:$0xff]
        %v1484 = vld [vmem:[%s501 + $0xf0] sm:$0xff]
        %v1485 = vld [vmem:[%s501 + $0xf8] sm:$0xff]
        %v1518 = vunpack.c.l.b16 %v1454
        %v1519 = vunpack.c.h.b16 %v1454
        %v1520 = vunpack.c.l.b16 %v1455
        %v1521 = vunpack.c.h.b16 %v1455
        %v1522 = vunpack.c.l.b16 %v1456
        %v1523 = vunpack.c.h.b16 %v1456
        %v1524 = vunpack.c.l.b16 %v1457
        %v1525 = vunpack.c.h.b16 %v1457
        %v1526 = vunpack.c.l.b16 %v1458
        %v1527 = vunpack.c.h.b16 %v1458
        %v1528 = vunpack.c.l.b16 %v1459
        %v1529 = vunpack.c.h.b16 %v1459
        %v1530 = vunpack.c.l.b16 %v1460
        %v1531 = vunpack.c.h.b16 %v1460
        %v1532 = vunpack.c.l.b16 %v1461
        %v1533 = vunpack.c.h.b16 %v1461
        %v1534 = vunpack.c.l.b16 %v1462
        %v1535 = vunpack.c.h.b16 %v1462
        %v1536 = vunpack.c.l.b16 %v1463
        %v1537 = vunpack.c.h.b16 %v1463
        %v1538 = vunpack.c.l.b16 %v1464
        %v1539 = vunpack.c.h.b16 %v1464
        %v1540 = vunpack.c.l.b16 %v1465
        %v1541 = vunpack.c.h.b16 %v1465
        %v1542 = vunpack.c.l.b16 %v1466
        %v1543 = vunpack.c.h.b16 %v1466
        %v1544 = vunpack.c.l.b16 %v1467
        %v1545 = vunpack.c.h.b16 %v1467
        %v1546 = vunpack.c.l.b16 %v1468
        %v1547 = vunpack.c.h.b16 %v1468
        %v1548 = vunpack.c.l.b16 %v1469
        %v1549 = vunpack.c.h.b16 %v1469
        %v1550 = vunpack.c.l.b16 %v1470
        %v1551 = vunpack.c.h.b16 %v1470
        %v1552 = vunpack.c.l.b16 %v1471
        %v1553 = vunpack.c.h.b16 %v1471
        %v1554 = vunpack.c.l.b16 %v1472
        %v1555 = vunpack.c.h.b16 %v1472
        %v1556 = vunpack.c.l.b16 %v1473
        %v1557 = vunpack.c.h.b16 %v1473
        %v1558 = vunpack.c.l.b16 %v1474
        %v1559 = vunpack.c.h.b16 %v1474
        %v1560 = vunpack.c.l.b16 %v1475
        %v1561 = vunpack.c.h.b16 %v1475
        %v1562 = vunpack.c.l.b16 %v1476
        %v1563 = vunpack.c.h.b16 %v1476
        %v1564 = vunpack.c.l.b16 %v1477
        %v1565 = vunpack.c.h.b16 %v1477
        %v1566 = vunpack.c.l.b16 %v1478
        %v1567 = vunpack.c.h.b16 %v1478
        %v1568 = vunpack.c.l.b16 %v1479
        %v1569 = vunpack.c.h.b16 %v1479
        %v1570 = vunpack.c.l.b16 %v1480
        %v1571 = vunpack.c.h.b16 %v1480
        %v1572 = vunpack.c.l.b16 %v1481
        %v1573 = vunpack.c.h.b16 %v1481
        %v1574 = vunpack.c.l.b16 %v1482
        %v1575 = vunpack.c.h.b16 %v1482
        %v1576 = vunpack.c.l.b16 %v1483
        %v1577 = vunpack.c.h.b16 %v1483
        %v1578 = vunpack.c.l.b16 %v1484
        %v1579 = vunpack.c.h.b16 %v1484
        %v1580 = vunpack.c.l.b16 %v1485
        %v1581 = vunpack.c.h.b16 %v1485
        %v1582 = vpack.c.b16 %v1522, %v1518
        %v1583 = vpack.c.b16 %v1523, %v1519
        %v1584 = vpack.c.b16 %v1524, %v1520
        %v1585 = vpack.c.b16 %v1525, %v1521
        %v1586 = vpack.c.b16 %v1530, %v1526
        %v1587 = vpack.c.b16 %v1531, %v1527
        %v1588 = vpack.c.b16 %v1532, %v1528
        %v1589 = vpack.c.b16 %v1533, %v1529
        %v1590 = vpack.c.b16 %v1538, %v1534
        %v1591 = vpack.c.b16 %v1539, %v1535
        %v1592 = vpack.c.b16 %v1540, %v1536
        %v1593 = vpack.c.b16 %v1541, %v1537
        %v1594 = vpack.c.b16 %v1546, %v1542
        %v1595 = vpack.c.b16 %v1547, %v1543
        %v1596 = vpack.c.b16 %v1548, %v1544
        %v1597 = vpack.c.b16 %v1549, %v1545
        %v1598 = vpack.c.b16 %v1554, %v1550
        %v1599 = vpack.c.b16 %v1555, %v1551
        %v1600 = vpack.c.b16 %v1556, %v1552
        %v1601 = vpack.c.b16 %v1557, %v1553
        %v1602 = vpack.c.b16 %v1562, %v1558
        %v1603 = vpack.c.b16 %v1563, %v1559
        %v1604 = vpack.c.b16 %v1564, %v1560
        %v1605 = vpack.c.b16 %v1565, %v1561
        %v1606 = vpack.c.b16 %v1570, %v1566
        %v1607 = vpack.c.b16 %v1571, %v1567
        %v1608 = vpack.c.b16 %v1572, %v1568
        %v1609 = vpack.c.b16 %v1573, %v1569
        %v1610 = vpack.c.b16 %v1578, %v1574
        %v1611 = vpack.c.b16 %v1579, %v1575
        %v1612 = vpack.c.b16 %v1580, %v1576
        %v1613 = vpack.c.b16 %v1581, %v1577
        %1646 = vmatprep.subr.bf16.mxu0 %v1611
        %1647 = vmatpush1.bf16.msra.mxu0 %v1610
        %1648 = vmatprep.subr.bf16.mxu0 %v1607
        %1649 = vmatpush1.bf16.msra.mxu0 %v1606
        %1650 = vmatprep.subr.bf16.mxu0 %v1603
        %1651 = vmatpush1.bf16.msra.mxu0 %v1602
        %1652 = vmatprep.subr.bf16.mxu0 %v1599
        %1653 = vmatpush1.bf16.msra.mxu0 %v1598
        %1654 = vmatprep.subr.bf16.mxu0 %v1595
        %1655 = vmatpush1.bf16.msra.mxu0 %v1594
        %1656 = vmatprep.subr.bf16.mxu0 %v1591
        %1657 = vmatpush1.bf16.msra.mxu0 %v1590
        %1658 = vmatprep.subr.bf16.mxu0 %v1587
        %1659 = vmatpush1.bf16.msra.mxu0 %v1586
        %1660 = vmatprep.subr.bf16.mxu0 %v1583
        %1661 = vmatpush1.bf16.msra.mxu0 %v1582
        %1662 = vmatprep.subr.bf16.mxu0 0
        %1663 = vmatpush2.bf16.msra.mxu0 0
        %1664 = vmatprep.subr.bf16.mxu0 0
        %1665 = vmatpush2.bf16.msra.mxu0 0
        %1666 = vmatprep.subr.bf16.mxu0 0
        %1667 = vmatpush2.bf16.msra.mxu0 0
        %1668 = vmatprep.subr.bf16.mxu0 0
        %1669 = vmatpush2.bf16.msra.mxu0 0
        %1670 = vmatprep.subr.bf16.mxu0 0
        %1671 = vmatpush2.bf16.msra.mxu0 0
        %1672 = vmatprep.subr.bf16.mxu0 0
        %1673 = vmatpush2.bf16.msra.mxu0 0
        %1674 = vmatprep.subr.bf16.mxu0 0
        %1675 = vmatpush2.bf16.msra.mxu0 0
        %1676 = vmatprep.subr.bf16.mxu0 0
        %1677 = vmatpush2.bf16.msra.mxu0 0
        %1678 = vmatprep.mubr.bf16.mxu0 0
        %1679 = vmatmul.mubr.bf16.gmra.mxu0 %v1453
        %v1680 = vpop.f32.mrf.mxu0
        %v1681 = vadd.f32 0.0, %v1680
        %v1682 = vpop.f32.mrf.mxu0
        %v1683 = vadd.f32 0.0, %v1682
        %v1684 = vpop.f32.mrf.mxu0
        %v1685 = vpop.f32.mrf.mxu0
        %1686 = vdwg.mxu0
        %1687 = vmatprep.subr.bf16.mxu0 %v1613
        %1688 = vmatpush1.bf16.msra.mxu0 %v1612
        %1689 = vmatprep.subr.bf16.mxu0 %v1609
        %1690 = vmatpush1.bf16.msra.mxu0 %v1608
        %1691 = vmatprep.subr.bf16.mxu0 %v1605
        %1692 = vmatpush1.bf16.msra.mxu0 %v1604
        %1693 = vmatprep.subr.bf16.mxu0 %v1601
        %1694 = vmatpush1.bf16.msra.mxu0 %v1600
        %1695 = vmatprep.subr.bf16.mxu0 %v1597
        %1696 = vmatpush1.bf16.msra.mxu0 %v1596
        %1697 = vmatprep.subr.bf16.mxu0 %v1593
        %1698 = vmatpush1.bf16.msra.mxu0 %v1592
        %1699 = vmatprep.subr.bf16.mxu0 %v1589
        %1700 = vmatpush1.bf16.msra.mxu0 %v1588
        %1701 = vmatprep.subr.bf16.mxu0 %v1585
        %1702 = vmatpush1.bf16.msra.mxu0 %v1584
        %1703 = vmatprep.subr.bf16.mxu0 0
        %1704 = vmatpush2.bf16.msra.mxu0 0
        %1705 = vmatprep.subr.bf16.mxu0 0
        %1706 = vmatpush2.bf16.msra.mxu0 0
        %1707 = vmatprep.subr.bf16.mxu0 0
        %1708 = vmatpush2.bf16.msra.mxu0 0
        %1709 = vmatprep.subr.bf16.mxu0 0
        %1710 = vmatpush2.bf16.msra.mxu0 0
        %1711 = vmatprep.subr.bf16.mxu0 0
        %1712 = vmatpush2.bf16.msra.mxu0 0
        %1713 = vmatprep.subr.bf16.mxu0 0
        %1714 = vmatpush2.bf16.msra.mxu0 0
        %1715 = vmatprep.subr.bf16.mxu0 0
        %1716 = vmatpush2.bf16.msra.mxu0 0
        %1717 = vmatprep.subr.bf16.mxu0 0
        %1718 = vmatpush2.bf16.msra.mxu0 0
        %1719 = vmatprep.mubr.bf16.mxu0 0
        %1720 = vmatmul.mubr.bf16.gmra.mxu0 %v1453
        %v1721 = vpop.f32.mrf.mxu0
        %v1722 = vadd.f32 0.0, %v1721
        %v1723 = vpop.f32.mrf.mxu0
        %v1724 = vadd.f32 0.0, %v1723
        %v1725 = vpop.f32.mrf.mxu0
        %v1726 = vpop.f32.mrf.mxu0
        %1727 = vdwg.mxu0
        %v1732 = vcombine.low %v1681, %v1683
        %v1733 = vcombine.low %v1722, %v1724
        %v1735 = vunpack.c.l.s4 1983009808
        %v1736 = vunpack.c.0.s8 %v1735
        %v1737 = vlaneseq
        %v1738 = vshrl.u32 %v1737, 7
        %v1739 = vsub.s32 %v1736, %v1738
        %v1740 = vrot.slane %v1732, %v1739
        %v1742 = vunpack.c.l.s4 1983009808
        %v1743 = vunpack.c.0.s8 %v1742
        %v1744 = vlaneseq
        %v1745 = vshrl.u32 %v1744, 7
        %v1746 = vsub.s32 %v1743, %v1745
        %v1747 = vrot.slane %v1733, %v1746
        %v1748 = vcombine.low %v1740, %v1747
        %v1750 = vadd.f32 %v1451, %v1748
        %1751 = vst [vmem:[#allocation3] sm:$0xff] %v1750
        %p1752 = scmp.eq.s32.totalorder %s28, 3
        // Predicated region
        $region93: #{encoder_forward.1} parent=75 // pred_check
          %p1753 = pneg %p1752
        $region94: #{encoder_forward.1} parent=75 // pred_check_branch
          %1755 = sbr.rel (%p1753) target = $region96
        $region95: #{encoder_forward.1} parent=75 // pred_region
          %v1756 = vld [vmem:[#allocation3] sm:$0xff]
          %v1757 = vld [vmem:[%s11] sm:$0xf]
          %v1759 = vlaneseq
          %v1760 = vshrl.u32 %v1759, 7
          %v1761 = vsub.s32 0, %v1760
          %v1762 = vrot.slane %v1757, %v1761
          %v1763 = vlaneseq
          %v1764 = vshrl.u32 %v1763, 7
          %v1765 = vsub.s32 1, %v1764
          %v1766 = vrot.slane %v1757, %v1765
          %v1767 = vlaneseq
          %v1768 = vshrl.u32 %v1767, 7
          %v1769 = vsub.s32 2, %v1768
          %v1770 = vrot.slane %v1757, %v1769
          %v1771 = vlaneseq
          %v1772 = vshrl.u32 %v1771, 7
          %v1773 = vsub.s32 3, %v1772
          %v1774 = vrot.slane %v1757, %v1773
          %v1775 = vcombine.low %v1762, %v1766
          %v1776 = vcombine.low %v1770, %v1774
          %v1778 = vunpack.c.l.s4 1983009808
          %v1779 = vunpack.c.0.s8 %v1778
          %v1780 = vlaneseq
          %v1781 = vshrl.u32 %v1780, 7
          %v1782 = vsub.s32 %v1779, %v1781
          %v1783 = vrot.slane %v1775, %v1782
          %v1785 = vunpack.c.l.s4 1983009808
          %v1786 = vunpack.c.0.s8 %v1785
          %v1787 = vlaneseq
          %v1788 = vshrl.u32 %v1787, 7
          %v1789 = vsub.s32 %v1786, %v1788
          %v1790 = vrot.slane %v1776, %v1789
          %v1791 = vcombine.low %v1783, %v1790
          %v1793 = vadd.f32 %v1756, %v1791
          %vm1794 = vcmp.ge.f32.partialorder %v1793, 0.0
          %v1795 = vmul.f32 %v1793, 0.2
          %v1796 = vsel %vm1794, %v1793, %v1795
          %v1798 = vcombine.high %v1796, %v1796
          %v1800 = vunpack.c.l.s4 1983009808
          %v1801 = vunpack.c.0.s8 %v1800
          %v1802 = vlaneseq
          %v1803 = vshrl.u32 %v1802, 7
          %v1804 = vsub.s32 %v1801, %v1803
          %v1805 = vrot.slane %v1796, %v1804
          %v1807 = vunpack.c.l.s4 1983009808
          %v1808 = vunpack.c.0.s8 %v1807
          %v1809 = vlaneseq
          %v1810 = vshrl.u32 %v1809, 7
          %v1811 = vsub.s32 %v1808, %v1810
          %v1812 = vrot.slane %v1798, %v1811
          %v1813 = vcombine.high %v1805, %v1805
          %v1814 = vcombine.high %v1812, %v1812
          %v1819 = vpack.c.bf16 %v1805, %v1805
          %v1820 = vpack.c.bf16 %v1813, %v1813
          %v1821 = vpack.c.bf16 %v1812, %v1812
          %v1822 = vpack.c.bf16 %v1814, %v1814
          %v1823 = vld [vmem:[#allocation9] sm:$0xf]
          %v1824 = vld [vmem:[#allocation9 + $0x4] sm:$0xf]
          %v1825 = vld [vmem:[#allocation9 + $0x8] sm:$0xf]
          %v1826 = vld [vmem:[#allocation9 + $0xc] sm:$0xf]
          %v1827 = vld [vmem:[#allocation9 + $0x10] sm:$0xf]
          %v1828 = vld [vmem:[#allocation9 + $0x14] sm:$0xf]
          %v1829 = vld [vmem:[#allocation9 + $0x18] sm:$0xf]
          %v1830 = vld [vmem:[#allocation9 + $0x1c] sm:$0xf]
          %v1831 = vld [vmem:[#allocation9 + $0x20] sm:$0xf]
          %v1832 = vld [vmem:[#allocation9 + $0x24] sm:$0xf]
          %v1833 = vld [vmem:[#allocation9 + $0x28] sm:$0xf]
          %v1834 = vld [vmem:[#allocation9 + $0x2c] sm:$0xf]
          %v1835 = vld [vmem:[#allocation9 + $0x30] sm:$0xf]
          %v1836 = vld [vmem:[#allocation9 + $0x34] sm:$0xf]
          %v1837 = vld [vmem:[#allocation9 + $0x38] sm:$0xf]
          %v1838 = vld [vmem:[#allocation9 + $0x3c] sm:$0xf]
          %v1839 = vld [vmem:[#allocation9 + $0x40] sm:$0xf]
          %v1840 = vld [vmem:[#allocation9 + $0x44] sm:$0xf]
          %v1841 = vld [vmem:[#allocation9 + $0x48] sm:$0xf]
          %v1842 = vld [vmem:[#allocation9 + $0x4c] sm:$0xf]
          %v1843 = vld [vmem:[#allocation9 + $0x50] sm:$0xf]
          %v1844 = vld [vmem:[#allocation9 + $0x54] sm:$0xf]
          %v1845 = vld [vmem:[#allocation9 + $0x58] sm:$0xf]
          %v1846 = vld [vmem:[#allocation9 + $0x5c] sm:$0xf]
          %v1847 = vld [vmem:[#allocation9 + $0x60] sm:$0xf]
          %v1848 = vld [vmem:[#allocation9 + $0x64] sm:$0xf]
          %v1849 = vld [vmem:[#allocation9 + $0x68] sm:$0xf]
          %v1850 = vld [vmem:[#allocation9 + $0x6c] sm:$0xf]
          %v1851 = vld [vmem:[#allocation9 + $0x70] sm:$0xf]
          %v1852 = vld [vmem:[#allocation9 + $0x74] sm:$0xf]
          %v1853 = vld [vmem:[#allocation9 + $0x78] sm:$0xf]
          %v1854 = vld [vmem:[#allocation9 + $0x7c] sm:$0xf]
          %v1855 = vld [vmem:[#allocation9 + $0x80] sm:$0xf]
          %v1856 = vld [vmem:[#allocation9 + $0x84] sm:$0xf]
          %v1857 = vld [vmem:[#allocation9 + $0x88] sm:$0xf]
          %v1858 = vld [vmem:[#allocation9 + $0x8c] sm:$0xf]
          %v1859 = vld [vmem:[#allocation9 + $0x90] sm:$0xf]
          %v1860 = vld [vmem:[#allocation9 + $0x94] sm:$0xf]
          %v1861 = vld [vmem:[#allocation9 + $0x98] sm:$0xf]
          %v1862 = vld [vmem:[#allocation9 + $0x9c] sm:$0xf]
          %v1863 = vld [vmem:[#allocation9 + $0xa0] sm:$0xf]
          %v1864 = vld [vmem:[#allocation9 + $0xa4] sm:$0xf]
          %v1865 = vld [vmem:[#allocation9 + $0xa8] sm:$0xf]
          %v1866 = vld [vmem:[#allocation9 + $0xac] sm:$0xf]
          %v1867 = vld [vmem:[#allocation9 + $0xb0] sm:$0xf]
          %v1868 = vld [vmem:[#allocation9 + $0xb4] sm:$0xf]
          %v1869 = vld [vmem:[#allocation9 + $0xb8] sm:$0xf]
          %v1870 = vld [vmem:[#allocation9 + $0xbc] sm:$0xf]
          %v1871 = vld [vmem:[#allocation9 + $0xc0] sm:$0xf]
          %v1872 = vld [vmem:[#allocation9 + $0xc4] sm:$0xf]
          %v1873 = vld [vmem:[#allocation9 + $0xc8] sm:$0xf]
          %v1874 = vld [vmem:[#allocation9 + $0xcc] sm:$0xf]
          %v1875 = vld [vmem:[#allocation9 + $0xd0] sm:$0xf]
          %v1876 = vld [vmem:[#allocation9 + $0xd4] sm:$0xf]
          %v1877 = vld [vmem:[#allocation9 + $0xd8] sm:$0xf]
          %v1878 = vld [vmem:[#allocation9 + $0xdc] sm:$0xf]
          %v1879 = vld [vmem:[#allocation9 + $0xe0] sm:$0xf]
          %v1880 = vld [vmem:[#allocation9 + $0xe4] sm:$0xf]
          %v1881 = vld [vmem:[#allocation9 + $0xe8] sm:$0xf]
          %v1882 = vld [vmem:[#allocation9 + $0xec] sm:$0xf]
          %v1883 = vld [vmem:[#allocation9 + $0xf0] sm:$0xf]
          %v1884 = vld [vmem:[#allocation9 + $0xf4] sm:$0xf]
          %v1885 = vld [vmem:[#allocation9 + $0xf8] sm:$0xf]
          %v1886 = vld [vmem:[#allocation9 + $0xfc] sm:$0xf]
          %v1887 = vld [vmem:[%s13] sm:$0x1]
          %v1889 = vlaneseq
          %v1890 = vshrl.u32 %v1889, 7
          %v1891 = vsub.s32 0, %v1890
          %v1892 = vrot.slane %v1887, %v1891
          %v1958 = vunpack.c.l.b16 %v1823
          %v1959 = vunpack.c.l.b16 %v1824
          %v1960 = vunpack.c.l.b16 %v1825
          %v1961 = vunpack.c.l.b16 %v1826
          %v1962 = vunpack.c.l.b16 %v1827
          %v1963 = vunpack.c.l.b16 %v1828
          %v1964 = vunpack.c.l.b16 %v1829
          %v1965 = vunpack.c.l.b16 %v1830
          %v1966 = vunpack.c.l.b16 %v1831
          %v1967 = vunpack.c.l.b16 %v1832
          %v1968 = vunpack.c.l.b16 %v1833
          %v1969 = vunpack.c.l.b16 %v1834
          %v1970 = vunpack.c.l.b16 %v1835
          %v1971 = vunpack.c.l.b16 %v1836
          %v1972 = vunpack.c.l.b16 %v1837
          %v1973 = vunpack.c.l.b16 %v1838
          %v1974 = vunpack.c.l.b16 %v1839
          %v1975 = vunpack.c.l.b16 %v1840
          %v1976 = vunpack.c.l.b16 %v1841
          %v1977 = vunpack.c.l.b16 %v1842
          %v1978 = vunpack.c.l.b16 %v1843
          %v1979 = vunpack.c.l.b16 %v1844
          %v1980 = vunpack.c.l.b16 %v1845
          %v1981 = vunpack.c.l.b16 %v1846
          %v1982 = vunpack.c.l.b16 %v1847
          %v1983 = vunpack.c.l.b16 %v1848
          %v1984 = vunpack.c.l.b16 %v1849
          %v1985 = vunpack.c.l.b16 %v1850
          %v1986 = vunpack.c.l.b16 %v1851
          %v1987 = vunpack.c.l.b16 %v1852
          %v1988 = vunpack.c.l.b16 %v1853
          %v1989 = vunpack.c.l.b16 %v1854
          %v1990 = vunpack.c.l.b16 %v1855
          %v1991 = vunpack.c.l.b16 %v1856
          %v1992 = vunpack.c.l.b16 %v1857
          %v1993 = vunpack.c.l.b16 %v1858
          %v1994 = vunpack.c.l.b16 %v1859
          %v1995 = vunpack.c.l.b16 %v1860
          %v1996 = vunpack.c.l.b16 %v1861
          %v1997 = vunpack.c.l.b16 %v1862
          %v1998 = vunpack.c.l.b16 %v1863
          %v1999 = vunpack.c.l.b16 %v1864
          %v2000 = vunpack.c.l.b16 %v1865
          %v2001 = vunpack.c.l.b16 %v1866
          %v2002 = vunpack.c.l.b16 %v1867
          %v2003 = vunpack.c.l.b16 %v1868
          %v2004 = vunpack.c.l.b16 %v1869
          %v2005 = vunpack.c.l.b16 %v1870
          %v2006 = vunpack.c.l.b16 %v1871
          %v2007 = vunpack.c.l.b16 %v1872
          %v2008 = vunpack.c.l.b16 %v1873
          %v2009 = vunpack.c.l.b16 %v1874
          %v2010 = vunpack.c.l.b16 %v1875
          %v2011 = vunpack.c.l.b16 %v1876
          %v2012 = vunpack.c.l.b16 %v1877
          %v2013 = vunpack.c.l.b16 %v1878
          %v2014 = vunpack.c.l.b16 %v1879
          %v2015 = vunpack.c.l.b16 %v1880
          %v2016 = vunpack.c.l.b16 %v1881
          %v2017 = vunpack.c.l.b16 %v1882
          %v2018 = vunpack.c.l.b16 %v1883
          %v2019 = vunpack.c.l.b16 %v1884
          %v2020 = vunpack.c.l.b16 %v1885
          %v2021 = vunpack.c.l.b16 %v1886
          %v2022 = vpack.c.b16 %v1959, %v1958
          %v2023 = vpack.c.b16 %v1961, %v1960
          %v2024 = vpack.c.b16 %v1963, %v1962
          %v2025 = vpack.c.b16 %v1965, %v1964
          %v2026 = vpack.c.b16 %v1967, %v1966
          %v2027 = vpack.c.b16 %v1969, %v1968
          %v2028 = vpack.c.b16 %v1971, %v1970
          %v2029 = vpack.c.b16 %v1973, %v1972
          %v2030 = vpack.c.b16 %v1975, %v1974
          %v2031 = vpack.c.b16 %v1977, %v1976
          %v2032 = vpack.c.b16 %v1979, %v1978
          %v2033 = vpack.c.b16 %v1981, %v1980
          %v2034 = vpack.c.b16 %v1983, %v1982
          %v2035 = vpack.c.b16 %v1985, %v1984
          %v2036 = vpack.c.b16 %v1987, %v1986
          %v2037 = vpack.c.b16 %v1989, %v1988
          %v2038 = vpack.c.b16 %v1991, %v1990
          %v2039 = vpack.c.b16 %v1993, %v1992
          %v2040 = vpack.c.b16 %v1995, %v1994
          %v2041 = vpack.c.b16 %v1997, %v1996
          %v2042 = vpack.c.b16 %v1999, %v1998
          %v2043 = vpack.c.b16 %v2001, %v2000
          %v2044 = vpack.c.b16 %v2003, %v2002
          %v2045 = vpack.c.b16 %v2005, %v2004
          %v2046 = vpack.c.b16 %v2007, %v2006
          %v2047 = vpack.c.b16 %v2009, %v2008
          %v2048 = vpack.c.b16 %v2011, %v2010
          %v2049 = vpack.c.b16 %v2013, %v2012
          %v2050 = vpack.c.b16 %v2015, %v2014
          %v2051 = vpack.c.b16 %v2017, %v2016
          %v2052 = vpack.c.b16 %v2019, %v2018
          %v2053 = vpack.c.b16 %v2021, %v2020
          %2086 = vmatprep.subr.bf16.mxu0 0
          %2087 = vmatpush1.bf16.msra.mxu0 %v2029
          %2088 = vmatprep.subr.bf16.mxu0 0
          %2089 = vmatpush1.bf16.msra.mxu0 %v2028
          %2090 = vmatprep.subr.bf16.mxu0 0
          %2091 = vmatpush1.bf16.msra.mxu0 %v2027
          %2092 = vmatprep.subr.bf16.mxu0 0
          %2093 = vmatpush1.bf16.msra.mxu0 %v2026
          %2094 = vmatprep.subr.bf16.mxu0 0
          %2095 = vmatpush1.bf16.msra.mxu0 %v2025
          %2096 = vmatprep.subr.bf16.mxu0 0
          %2097 = vmatpush1.bf16.msra.mxu0 %v2024
          %2098 = vmatprep.subr.bf16.mxu0 0
          %2099 = vmatpush1.bf16.msra.mxu0 %v2023
          %2100 = vmatprep.subr.bf16.mxu0 0
          %2101 = vmatpush1.bf16.msra.mxu0 %v2022
          %2102 = vmatprep.subr.bf16.mxu0 0
          %2103 = vmatpush2.bf16.msra.mxu0 %v2037
          %2104 = vmatprep.subr.bf16.mxu0 0
          %2105 = vmatpush2.bf16.msra.mxu0 %v2036
          %2106 = vmatprep.subr.bf16.mxu0 0
          %2107 = vmatpush2.bf16.msra.mxu0 %v2035
          %2108 = vmatprep.subr.bf16.mxu0 0
          %2109 = vmatpush2.bf16.msra.mxu0 %v2034
          %2110 = vmatprep.subr.bf16.mxu0 0
          %2111 = vmatpush2.bf16.msra.mxu0 %v2033
          %2112 = vmatprep.subr.bf16.mxu0 0
          %2113 = vmatpush2.bf16.msra.mxu0 %v2032
          %2114 = vmatprep.subr.bf16.mxu0 0
          %2115 = vmatpush2.bf16.msra.mxu0 %v2031
          %2116 = vmatprep.subr.bf16.mxu0 0
          %2117 = vmatpush2.bf16.msra.mxu0 %v2030
          %2118 = vmatprep.mubr.bf16.mxu0 %v1820
          %2119 = vmatmul.mubr.bf16.gmra.mxu0 %v1819
          %v2120 = vpop.f32.mrf.mxu0
          %v2121 = vadd.f32 %v1892, %v2120
          %v2122 = vpop.f32.mrf.mxu0
          %v2123 = vpop.f32.mrf.mxu0
          %v2124 = vpop.f32.mrf.mxu0
          %2125 = vdwg.mxu0
          %2126 = vmatprep.subr.bf16.mxu0 0
          %2127 = vmatpush1.bf16.msra.mxu0 %v2045
          %2128 = vmatprep.subr.bf16.mxu0 0
          %2129 = vmatpush1.bf16.msra.mxu0 %v2044
          %2130 = vmatprep.subr.bf16.mxu0 0
          %2131 = vmatpush1.bf16.msra.mxu0 %v2043
          %2132 = vmatprep.subr.bf16.mxu0 0
          %2133 = vmatpush1.bf16.msra.mxu0 %v2042
          %2134 = vmatprep.subr.bf16.mxu0 0
          %2135 = vmatpush1.bf16.msra.mxu0 %v2041
          %2136 = vmatprep.subr.bf16.mxu0 0
          %2137 = vmatpush1.bf16.msra.mxu0 %v2040
          %2138 = vmatprep.subr.bf16.mxu0 0
          %2139 = vmatpush1.bf16.msra.mxu0 %v2039
          %2140 = vmatprep.subr.bf16.mxu0 0
          %2141 = vmatpush1.bf16.msra.mxu0 %v2038
          %2142 = vmatprep.subr.bf16.mxu0 0
          %2143 = vmatpush2.bf16.msra.mxu0 %v2053
          %2144 = vmatprep.subr.bf16.mxu0 0
          %2145 = vmatpush2.bf16.msra.mxu0 %v2052
          %2146 = vmatprep.subr.bf16.mxu0 0
          %2147 = vmatpush2.bf16.msra.mxu0 %v2051
          %2148 = vmatprep.subr.bf16.mxu0 0
          %2149 = vmatpush2.bf16.msra.mxu0 %v2050
          %2150 = vmatprep.subr.bf16.mxu0 0
          %2151 = vmatpush2.bf16.msra.mxu0 %v2049
          %2152 = vmatprep.subr.bf16.mxu0 0
          %2153 = vmatpush2.bf16.msra.mxu0 %v2048
          %2154 = vmatprep.subr.bf16.mxu0 0
          %2155 = vmatpush2.bf16.msra.mxu0 %v2047
          %2156 = vmatprep.subr.bf16.mxu0 0
          %2157 = vmatpush2.bf16.msra.mxu0 %v2046
          %2158 = vmatprep.mubr.bf16.mxu0 %v1822
          %2159 = vmatmul.mubr.bf16.gmra.mxu0 %v1821
          %v2160 = vpop.f32.mrf.mxu0
          %v2161 = vadd.f32 %v2121, %v2160
          %v2162 = vpop.f32.mrf.mxu0
          %v2163 = vpop.f32.mrf.mxu0
          %v2164 = vpop.f32.mrf.mxu0
          %2165 = vdwg.mxu0
          %2166 = vst [vmem:[#allocation10] sm:$0x3] %v2161
        $region96: #{encoder_forward.1} parent=75 // pred_fallthru
          _
        // Predicated region
        $region97: #{encoder_forward.1} parent=75 // pred_check
          %p2167 = pneg %p340
        $region98: #{encoder_forward.1} parent=75 // pred_check_branch
          %2169 = sbr.rel (%p2167) target = $region100
        $region99: #{encoder_forward.1} parent=75 // pred_region
          %s2171 = ssub.s32 32, 32
          %2172 = vsyncadd [#allocation6], %s2171
          %s2174 = sshll.u32 [#allocation10], 4
          %s2175 = int_to_ptr.vmem [resolvable:$true] %s2174
          %2177 = dma.vmem_to_hbm [thread:$0]  %s2175, 32, %s14, [#allocation6]
        $region100: #{encoder_forward.1} parent=75 // pred_fallthru
          _
        // Predicated region
        $region101: #{encoder_forward.1} parent=75 // pred_check
          %p2178 = pneg %p340
        $region102: #{encoder_forward.1} parent=75 // pred_check_branch
          %2180 = sbr.rel (%p2178) target = $region104
        $region103: #{encoder_forward.1} parent=75 // pred_region
          %2181 = dma.done [#allocation6], 32
        $region104: #{encoder_forward.1} parent=75 // pred_fallthru
          _
      $region76: #{encoder_forward.1} parent=5 // pred_fallthru
        _
      %p2182 = scmp.le.s32.totalorder 2, %s23
      // Predicated region
      $region105: #{encoder_forward.1} parent=5 // pred_check
        %p2183 = pneg %p2182
      $region106: #{encoder_forward.1} parent=5 // pred_check_branch
        %2185 = sbr.rel (%p2183) target = $region108
      $region107: #{encoder_forward.1} parent=5 // pred_region
        %s2186 = ssub.s32 %s23, 2
      $region108: #{encoder_forward.1} parent=5 // pred_fallthru
        _
    $region6: #{encoder_forward.1} parent=1 // loop_footer
      %s27 = sadd.s32 1, %s23
    $region7: #{encoder_forward.1} parent=1 // loop_footer_branch
      %22 = sbr.rel target = $region3
    $region8: #{encoder_forward.1} parent=1 // loop_exit
      _
    %2187 = vsyncpa [#allocation5], 1
    %s2188 = scalar_lea.sflag [#allocation5], 1
    %2189 = vsyncpa %s2188, 1
    %2190 = vsyncpa [#allocation8], 1
    %2191 = vsyncpa [#allocation6], 1
    %s2192 = scalar_lea.sflag [#allocation6], 1
    %2193 = vsyncpa %s2192, 1

</llo_original>
